<compile_context>
chip_gen: v6e
topology: v6e:2x2x1
jax: 0.10.0
libtpu: 0.0.40
codegen_flags: <defaults>
</compile_context>

<pallas_src>
import math
import jax
import jax.numpy as jnp
from jax.experimental import pallas as pl
from jax.experimental.pallas import tpu as pltpu

# ---- small, forward-consistent hyperparameters -----------------------------
B, S, E = 2, 8, 32          # batch, seq_len, embedding_dim
NHEAD = 4                   # nhead (E % NHEAD == 0)
DH = E // NHEAD             # head dim
DFF = 64                    # dim_feed_forward
NUM_LAYERS = 2              # num_decoder_layers
OUT = 10                    # out_size
NEG = -1e9                  # additive bias for masked / cross-batch keys
LN_EPS = 1e-5
LANES = 128                 # lane-dense slab width

# per-layer weight-slab row offsets (all sublane-aligned)
ROW_WQKV = 0                # (E, 3E)  in cols 0:96   [Q | K | V], head h -> h*DH
ROW_WO = E                  # (E, E)   in cols 0:E
ROW_W1 = 2 * E              # (E, DFF) in cols 0:DFF
ROW_W2 = 3 * E              # (128, E) rows 0:DFF real, rest zero
LW_ROWS = ROW_W2 + LANES    # 224
# head-slab row offsets
ROW_WM1 = 0                 # (E, DFF) in cols 0:DFF
ROW_WOUT = E                # (128, 128) rows 0:DFF real, cols 0:OUT real
HW_ROWS = ROW_WOUT + LANES  # 160


# ---------------------------------------------------------------------------
# Single fused Pallas kernel: PE add -> NUM_LAYERS x encoder layer -> MLP head
# Activations are a flat (T = B*S, E) token slab; batches are separated in
# attention by the precomputed block-diagonal + key-padding additive bias.
# ---------------------------------------------------------------------------
def fused_decoder_kernel(x_ref, pe_ref, bias_ref,
                         lw_ref, lv_ref, hw_ref, hv_ref, o_ref):
    scale = 1.0 / math.sqrt(DH)

    def layer_norm(y, g, b):
        mu = jnp.mean(y, axis=-1, keepdims=True)
        var = jnp.mean((y - mu) ** 2, axis=-1, keepdims=True)
        return (y - mu) * jax.lax.rsqrt(var + LN_EPS) * g + b

    def mm(a_f32, w_bf16):  # bf16 MXU operands, f32 accumulation
        return jnp.dot(a_f32.astype(jnp.bfloat16), w_bf16,
                       preferred_element_type=jnp.float32)

    # --- positional-encoding add (dropout is identity in eval mode) ---
    xf = x_ref[...] + pe_ref[...]                    # (T, E) f32
    bias = bias_ref[...]                             # (T, T) f32 additive mask

    for l in range(NUM_LAYERS):                      # static unroll (L = 2)
        lvl = lv_ref[l]                              # (8, 128) f32 biases + LN params

        # ---- fused QKV projection: one lane-dense bf16 matmul ----
        qkv = mm(xf, lw_ref[l, ROW_WQKV:ROW_WQKV + E, :]) + lvl[0:1, :]
        qkv = qkv.astype(jnp.bfloat16)               # q/k/v only feed matmuls

        # ---- multi-head attention (2-D NT matmuls per head, f32 softmax) ----
        ctx_parts = []
        for h in range(NHEAD):
            qh = qkv[:, h * DH:(h + 1) * DH]                     # (T, DH) bf16
            kh = qkv[:, E + h * DH:E + (h + 1) * DH]
            vh = qkv[:, 2 * E + h * DH:2 * E + (h + 1) * DH]
            s = jax.lax.dot_general(qh, kh, (((1,), (1,)), ((), ())),
                                    preferred_element_type=jnp.float32)
            s = s * scale + bias                                 # (T, T) f32
            s = s - jnp.max(s, axis=-1, keepdims=True)
            p = jnp.exp(s)
            p = p * pl.reciprocal(jnp.sum(p, axis=-1, keepdims=True), approx=True)
            ctx_parts.append(jnp.dot(p.astype(jnp.bfloat16), vh,
                                     preferred_element_type=jnp.float32))
        ctx = jnp.concatenate(ctx_parts, axis=-1)                # (T, H*DH) merge

        # ---- out projection: one matmul, then residual + post-LN 1 ----
        attn = (mm(ctx, lw_ref[l, ROW_WO:ROW_WO + E, :]) + lvl[1:2, :])[:, :E]
        y = layer_norm(xf + attn, lvl[4:5, :E], lvl[5:6, :E])

        # ---- feed-forward (relu) + residual + post-LN 2 ----
        h1 = jnp.maximum(mm(y, lw_ref[l, ROW_W1:ROW_W1 + E, :]) + lvl[2:3, :], 0.0)
        h2 = (mm(h1, lw_ref[l, ROW_W2:ROW_W2 + LANES, :]) + lvl[3:4, :])[:, :E]
        xf = layer_norm(y + h2, lvl[6:7, :E], lvl[7:8, :E])

    # ---- MLP head (Linear -> ReLU -> Linear) + Categorical log-softmax ----
    hm = jnp.maximum(mm(xf, hw_ref[ROW_WM1:ROW_WM1 + E, :]) + hv_ref[0:1, :], 0.0)
    logits = mm(hm, hw_ref[ROW_WOUT:ROW_WOUT + LANES, :]) + hv_ref[1:2, :]
    # pad columns (>= OUT) carry -1e30 -> exp underflows to 0, lse is exact.
    m = jnp.max(logits, axis=-1, keepdims=True)
    lse = jnp.log(jnp.sum(jnp.exp(logits - m), axis=-1, keepdims=True)) + m
    o_ref[...] = (logits - lse).astype(o_ref.dtype)              # (T, 128) dense store


# ---------------------------------------------------------------------------
# glue: positional encoding + packed-slab parameter construction + forward
# ---------------------------------------------------------------------------
def positional_encoding(seq_len, d_model):
    pos = jnp.arange(seq_len, dtype=jnp.float32)[:, None]
    div = jnp.exp(jnp.arange(0, d_model, 2, dtype=jnp.float32)
                  * (-math.log(10000.0) / d_model))
    pe = jnp.zeros((seq_len, d_model), jnp.float32)
    pe = pe.at[:, 0::2].set(jnp.sin(pos * div))
    pe = pe.at[:, 1::2].set(jnp.cos(pos * div))
    return pe


def init_packed_params(key):
    def dense(k, shape):
        return jax.random.normal(k, shape, jnp.float32) * 0.02

    ks = jax.random.split(key, 6)
    L = NUM_LAYERS
    # raw weights, (in_features, out_features)
    wqkv = dense(ks[0], (L, E, 3 * E))   # cols [Q | K | V], head h -> cols h*DH
    wo = dense(ks[1], (L, E, E))
    w1 = dense(ks[2], (L, E, DFF))
    w2 = dense(ks[3], (L, DFF, E))
    wm1 = dense(ks[4], (E, DFF))
    wout = dense(ks[5], (DFF, OUT))

    # --- per-layer matmul-weight slab (bf16, lane-dense 128 cols) ---
    lw = jnp.zeros((L, LW_ROWS, LANES), jnp.float32)
    lw = lw.at[:, ROW_WQKV:ROW_WQKV + E, 0:3 * E].set(wqkv)
    lw = lw.at[:, ROW_WO:ROW_WO + E, 0:E].set(wo)
    lw = lw.at[:, ROW_W1:ROW_W1 + E, 0:DFF].set(w1)
    lw = lw.at[:, ROW_W2:ROW_W2 + DFF, 0:E].set(w2)          # rows DFF:128 stay zero
    lw = lw.astype(jnp.bfloat16)

    # --- per-layer vector slab (f32): rows = bqkv, bo, b1, b2, ln1g, ln1b, ln2g, ln2b
    lv = jnp.zeros((L, 8, LANES), jnp.float32)               # all biases zero-init
    lv = lv.at[:, 4, 0:E].set(1.0)                           # ln1 gamma
    lv = lv.at[:, 6, 0:E].set(1.0)                           # ln2 gamma

    # --- MLP-head weight slab (bf16) ---
    hw = jnp.zeros((HW_ROWS, LANES), jnp.float32)
    hw = hw.at[ROW_WM1:ROW_WM1 + E, 0:DFF].set(wm1)
    hw = hw.at[ROW_WOUT:ROW_WOUT + DFF, 0:OUT].set(wout)     # pad rows/cols stay zero
    hw = hw.astype(jnp.bfloat16)

    # --- MLP-head vector slab (f32): row0 = bm1, row1 = bout (pads = -1e30) ---
    hv = jnp.zeros((2, LANES), jnp.float32)
    hv = hv.at[1, OUT:].set(-1e30)                           # kill pad logits
    return {"lw": lw, "lv": lv, "hw": hw, "hv": hv}


@jax.jit
def transformer_decoder_forward(embeddings, mask, params):
    Bv, Sv, Ev = embeddings.shape
    T = Bv * Sv
    # layout plumbing only (tiny metadata reshapes / constants); compute is in-kernel
    x_flat = embeddings.reshape(T, Ev)
    pe_tiled = jnp.tile(positional_encoding(Sv, Ev), (Bv, 1))         # (T, E) constant
    # additive attention bias: block-diagonal over batches + key-padding mask
    rb = jnp.arange(T, dtype=jnp.int32)[:, None] // Sv
    cb = jnp.arange(T, dtype=jnp.int32)[None, :] // Sv
    keypad = mask.astype(jnp.float32).reshape(1, T)                   # 1.0 == padded key
    bias = jnp.where(rb == cb, 0.0, NEG) + keypad * NEG               # (T, T)
    # TODO(synk): a fully-padded key row gives a uniform softmax where PyTorch's
    # key_padding_mask would produce NaN; not exercised by the given mask.

    vmem = pl.BlockSpec(memory_space=pltpu.MemorySpace.VMEM)          # whole array, VMEM
    out_pad = pl.pallas_call(
        fused_decoder_kernel,
        out_shape=jax.ShapeDtypeStruct((T, LANES), jnp.float32),
        in_specs=[vmem] * 7,
        out_specs=vmem,
    )(x_flat, pe_tiled, bias,
      params["lw"], params["lv"], params["hw"], params["hv"])
    # TODO(synk): Categorical is a distribution object; we return its .logits
    # (log-softmax of the MLP output), computed inside the kernel.
    return out_pad[:, :OUT].reshape(Bv, Sv, OUT)


if __name__ == "__main__":
    key = jax.random.PRNGKey(0)
    key, k_emb = jax.random.split(key)
    embeddings = jax.random.normal(k_emb, (B, S, E), jnp.float32)
    # batch 0: no padding; batch 1: last two positions padded
    mask = jnp.array([[False] * S,
                      [False] * (S - 2) + [True] * 2], dtype=jnp.bool_)
    params = init_packed_params(key)

    out = transformer_decoder_forward(embeddings, mask, params)
    out = jax.block_until_ready(out)
    assert out.shape == (B, S, OUT)
    assert bool(jnp.all(jnp.isfinite(out)))
    # log_softmax rows must (approximately) normalize to 1 in prob space
    assert bool(jnp.all(jnp.abs(jnp.sum(jnp.exp(out), axis=-1) - 1.0) < 1e-3))
    print("KERNEL_OK")
</pallas_src>

<mosaic_0001>
module attributes {stable_mosaic.version = 11 : i64} {
  func.func @fused_decoder_kernel(%arg0: memref<16x32xf32, #tpu.memory_space<vmem>>, %arg1: memref<16x32xf32, #tpu.memory_space<vmem>>, %arg2: memref<16x16xf32, #tpu.memory_space<vmem>>, %arg3: memref<2x224x128xbf16, #tpu.memory_space<vmem>>, %arg4: memref<2x8x128xf32, #tpu.memory_space<vmem>>, %arg5: memref<160x128xbf16, #tpu.memory_space<vmem>>, %arg6: memref<2x128xf32, #tpu.memory_space<vmem>>, %arg7: memref<16x128xf32, #tpu.memory_space<vmem>>) attributes {dimension_semantics = [], scalar_prefetch = 0 : i64, scratch_operands = 0 : i64, tpu.core_type = #tpu.core_type<tc>} {
    %c0 = arith.constant 0 : index
    %c0_0 = arith.constant 0 : index
    %0 = vector.load %arg0[%c0, %c0_0] : memref<16x32xf32, #tpu.memory_space<vmem>>, vector<16x32xf32>
    %c0_1 = arith.constant 0 : index
    %c0_2 = arith.constant 0 : index
    %1 = vector.load %arg1[%c0_1, %c0_2] : memref<16x32xf32, #tpu.memory_space<vmem>>, vector<16x32xf32>
    %2 = arith.addf %0, %1 : vector<16x32xf32>
    %c0_3 = arith.constant 0 : index
    %c0_4 = arith.constant 0 : index
    %3 = vector.load %arg2[%c0_3, %c0_4] : memref<16x16xf32, #tpu.memory_space<vmem>>, vector<16x16xf32>
    %c0_5 = arith.constant 0 : index
    %c0_6 = arith.constant 0 : index
    %c0_7 = arith.constant 0 : index
    %4 = vector.load %arg4[%c0_5, %c0_6, %c0_7] : memref<2x8x128xf32, #tpu.memory_space<vmem>>, vector<1x8x128xf32>
    %5 = vector.shape_cast %4 : vector<1x8x128xf32> to vector<8x128xf32>
    %c0_8 = arith.constant 0 : index
    %c0_9 = arith.constant 0 : index
    %c0_10 = arith.constant 0 : index
    %6 = vector.load %arg3[%c0_8, %c0_9, %c0_10] : memref<2x224x128xbf16, #tpu.memory_space<vmem>>, vector<1x32x128xbf16>
    %7 = vector.shape_cast %6 : vector<1x32x128xbf16> to vector<32x128xbf16>
    %8 = arith.truncf %2 : vector<16x32xf32> to vector<16x32xbf16>
    %cst = arith.constant dense<0.000000e+00> : vector<16x128xf32>
    %9 = tpu.matmul %8, %7, %cst {dimension_numbers = #tpu.dot_dimension_numbers<[1], [0], [0], [1], [0, 0, 1, 1], [], []>} : vector<16x32xbf16>, vector<32x128xbf16>, vector<16x128xf32> -> vector<16x128xf32>
    %10 = vector.extract_strided_slice %5 {offsets = [0, 0], sizes = [1, 128], strides = [1, 1]} : vector<8x128xf32> to vector<1x128xf32>
    %11 = vector.broadcast %10 : vector<1x128xf32> to vector<16x128xf32>
    %12 = arith.addf %9, %11 : vector<16x128xf32>
    %13 = arith.truncf %12 : vector<16x128xf32> to vector<16x128xbf16>
    %14 = vector.extract_strided_slice %13 {offsets = [0, 0], sizes = [16, 8], strides = [1, 1]} : vector<16x128xbf16> to vector<16x8xbf16>
    %15 = vector.extract_strided_slice %13 {offsets = [0, 32], sizes = [16, 8], strides = [1, 1]} : vector<16x128xbf16> to vector<16x8xbf16>
    %16 = vector.extract_strided_slice %13 {offsets = [0, 64], sizes = [16, 8], strides = [1, 1]} : vector<16x128xbf16> to vector<16x8xbf16>
    %cst_11 = arith.constant dense<0.000000e+00> : vector<16x16xf32>
    %17 = tpu.matmul %14, %15, %cst_11 {dimension_numbers = #tpu.dot_dimension_numbers<[1], [1], [0], [0], [0, 0, 1, 0], [], []>} : vector<16x8xbf16>, vector<16x8xbf16>, vector<16x16xf32> -> vector<16x16xf32>
    %cst_12 = arith.constant 0.353553385 : f32
    %18 = vector.broadcast %cst_12 : f32 to vector<16x16xf32>
    %19 = arith.mulf %17, %18 : vector<16x16xf32>
    %20 = arith.addf %19, %3 : vector<16x16xf32>
    %cst_13 = arith.constant dense<0xFF800000> : vector<16xf32>
    %21 = vector.multi_reduction <maximumf>, %20, %cst_13 [1] : vector<16x16xf32> to vector<16xf32>
    %22 = vector.shape_cast %21 : vector<16xf32> to vector<16x1xf32>
    %23 = vector.broadcast %22 : vector<16x1xf32> to vector<16x16xf32>
    %24 = arith.subf %20, %23 : vector<16x16xf32>
    %25 = math.exp %24 : vector<16x16xf32>
    %cst_14 = arith.constant dense<0.000000e+00> : vector<16xf32>
    %26 = vector.multi_reduction <add>, %25, %cst_14 [1] : vector<16x16xf32> to vector<16xf32>
    %27 = vector.shape_cast %26 : vector<16xf32> to vector<16x1xf32>
    %28 = tpu.reciprocal %27 {approx = true} : vector<16x1xf32> -> vector<16x1xf32>
    %29 = vector.broadcast %28 : vector<16x1xf32> to vector<16x16xf32>
    %30 = arith.mulf %25, %29 : vector<16x16xf32>
    %31 = arith.truncf %30 : vector<16x16xf32> to vector<16x16xbf16>
    %cst_15 = arith.constant dense<0.000000e+00> : vector<16x8xf32>
    %32 = tpu.matmul %31, %16, %cst_15 {dimension_numbers = #tpu.dot_dimension_numbers<[1], [0], [0], [1], [0, 0, 1, 1], [], []>} : vector<16x16xbf16>, vector<16x8xbf16>, vector<16x8xf32> -> vector<16x8xf32>
    %33 = vector.extract_strided_slice %13 {offsets = [0, 8], sizes = [16, 8], strides = [1, 1]} : vector<16x128xbf16> to vector<16x8xbf16>
    %34 = vector.extract_strided_slice %13 {offsets = [0, 40], sizes = [16, 8], strides = [1, 1]} : vector<16x128xbf16> to vector<16x8xbf16>
    %35 = vector.extract_strided_slice %13 {offsets = [0, 72], sizes = [16, 8], strides = [1, 1]} : vector<16x128xbf16> to vector<16x8xbf16>
    %cst_16 = arith.constant dense<0.000000e+00> : vector<16x16xf32>
    %36 = tpu.matmul %33, %34, %cst_16 {dimension_numbers = #tpu.dot_dimension_numbers<[1], [1], [0], [0], [0, 0, 1, 0], [], []>} : vector<16x8xbf16>, vector<16x8xbf16>, vector<16x16xf32> -> vector<16x16xf32>
    %cst_17 = arith.constant 0.353553385 : f32
    %37 = vector.broadcast %cst_17 : f32 to vector<16x16xf32>
    %38 = arith.mulf %36, %37 : vector<16x16xf32>
    %39 = arith.addf %38, %3 : vector<16x16xf32>
    %cst_18 = arith.constant dense<0xFF800000> : vector<16xf32>
    %40 = vector.multi_reduction <maximumf>, %39, %cst_18 [1] : vector<16x16xf32> to vector<16xf32>
    %41 = vector.shape_cast %40 : vector<16xf32> to vector<16x1xf32>
    %42 = vector.broadcast %41 : vector<16x1xf32> to vector<16x16xf32>
    %43 = arith.subf %39, %42 : vector<16x16xf32>
    %44 = math.exp %43 : vector<16x16xf32>
    %cst_19 = arith.constant dense<0.000000e+00> : vector<16xf32>
    %45 = vector.multi_reduction <add>, %44, %cst_19 [1] : vector<16x16xf32> to vector<16xf32>
    %46 = vector.shape_cast %45 : vector<16xf32> to vector<16x1xf32>
    %47 = tpu.reciprocal %46 {approx = true} : vector<16x1xf32> -> vector<16x1xf32>
    %48 = vector.broadcast %47 : vector<16x1xf32> to vector<16x16xf32>
    %49 = arith.mulf %44, %48 : vector<16x16xf32>
    %50 = arith.truncf %49 : vector<16x16xf32> to vector<16x16xbf16>
    %cst_20 = arith.constant dense<0.000000e+00> : vector<16x8xf32>
    %51 = tpu.matmul %50, %35, %cst_20 {dimension_numbers = #tpu.dot_dimension_numbers<[1], [0], [0], [1], [0, 0, 1, 1], [], []>} : vector<16x16xbf16>, vector<16x8xbf16>, vector<16x8xf32> -> vector<16x8xf32>
    %52 = vector.extract_strided_slice %13 {offsets = [0, 16], sizes = [16, 8], strides = [1, 1]} : vector<16x128xbf16> to vector<16x8xbf16>
    %53 = vector.extract_strided_slice %13 {offsets = [0, 48], sizes = [16, 8], strides = [1, 1]} : vector<16x128xbf16> to vector<16x8xbf16>
    %54 = vector.extract_strided_slice %13 {offsets = [0, 80], sizes = [16, 8], strides = [1, 1]} : vector<16x128xbf16> to vector<16x8xbf16>
    %cst_21 = arith.constant dense<0.000000e+00> : vector<16x16xf32>
    %55 = tpu.matmul %52, %53, %cst_21 {dimension_numbers = #tpu.dot_dimension_numbers<[1], [1], [0], [0], [0, 0, 1, 0], [], []>} : vector<16x8xbf16>, vector<16x8xbf16>, vector<16x16xf32> -> vector<16x16xf32>
    %cst_22 = arith.constant 0.353553385 : f32
    %56 = vector.broadcast %cst_22 : f32 to vector<16x16xf32>
    %57 = arith.mulf %55, %56 : vector<16x16xf32>
    %58 = arith.addf %57, %3 : vector<16x16xf32>
    %cst_23 = arith.constant dense<0xFF800000> : vector<16xf32>
    %59 = vector.multi_reduction <maximumf>, %58, %cst_23 [1] : vector<16x16xf32> to vector<16xf32>
    %60 = vector.shape_cast %59 : vector<16xf32> to vector<16x1xf32>
    %61 = vector.broadcast %60 : vector<16x1xf32> to vector<16x16xf32>
    %62 = arith.subf %58, %61 : vector<16x16xf32>
    %63 = math.exp %62 : vector<16x16xf32>
    %cst_24 = arith.constant dense<0.000000e+00> : vector<16xf32>
    %64 = vector.multi_reduction <add>, %63, %cst_24 [1] : vector<16x16xf32> to vector<16xf32>
    %65 = vector.shape_cast %64 : vector<16xf32> to vector<16x1xf32>
    %66 = tpu.reciprocal %65 {approx = true} : vector<16x1xf32> -> vector<16x1xf32>
    %67 = vector.broadcast %66 : vector<16x1xf32> to vector<16x16xf32>
    %68 = arith.mulf %63, %67 : vector<16x16xf32>
    %69 = arith.truncf %68 : vector<16x16xf32> to vector<16x16xbf16>
    %cst_25 = arith.constant dense<0.000000e+00> : vector<16x8xf32>
    %70 = tpu.matmul %69, %54, %cst_25 {dimension_numbers = #tpu.dot_dimension_numbers<[1], [0], [0], [1], [0, 0, 1, 1], [], []>} : vector<16x16xbf16>, vector<16x8xbf16>, vector<16x8xf32> -> vector<16x8xf32>
    %71 = vector.extract_strided_slice %13 {offsets = [0, 24], sizes = [16, 8], strides = [1, 1]} : vector<16x128xbf16> to vector<16x8xbf16>
    %72 = vector.extract_strided_slice %13 {offsets = [0, 56], sizes = [16, 8], strides = [1, 1]} : vector<16x128xbf16> to vector<16x8xbf16>
    %73 = vector.extract_strided_slice %13 {offsets = [0, 88], sizes = [16, 8], strides = [1, 1]} : vector<16x128xbf16> to vector<16x8xbf16>
    %cst_26 = arith.constant dense<0.000000e+00> : vector<16x16xf32>
    %74 = tpu.matmul %71, %72, %cst_26 {dimension_numbers = #tpu.dot_dimension_numbers<[1], [1], [0], [0], [0, 0, 1, 0], [], []>} : vector<16x8xbf16>, vector<16x8xbf16>, vector<16x16xf32> -> vector<16x16xf32>
    %cst_27 = arith.constant 0.353553385 : f32
    %75 = vector.broadcast %cst_27 : f32 to vector<16x16xf32>
    %76 = arith.mulf %74, %75 : vector<16x16xf32>
    %77 = arith.addf %76, %3 : vector<16x16xf32>
    %cst_28 = arith.constant dense<0xFF800000> : vector<16xf32>
    %78 = vector.multi_reduction <maximumf>, %77, %cst_28 [1] : vector<16x16xf32> to vector<16xf32>
    %79 = vector.shape_cast %78 : vector<16xf32> to vector<16x1xf32>
    %80 = vector.broadcast %79 : vector<16x1xf32> to vector<16x16xf32>
    %81 = arith.subf %77, %80 : vector<16x16xf32>
    %82 = math.exp %81 : vector<16x16xf32>
    %cst_29 = arith.constant dense<0.000000e+00> : vector<16xf32>
    %83 = vector.multi_reduction <add>, %82, %cst_29 [1] : vector<16x16xf32> to vector<16xf32>
    %84 = vector.shape_cast %83 : vector<16xf32> to vector<16x1xf32>
    %85 = tpu.reciprocal %84 {approx = true} : vector<16x1xf32> -> vector<16x1xf32>
    %86 = vector.broadcast %85 : vector<16x1xf32> to vector<16x16xf32>
    %87 = arith.mulf %82, %86 : vector<16x16xf32>
    %88 = arith.truncf %87 : vector<16x16xf32> to vector<16x16xbf16>
    %cst_30 = arith.constant dense<0.000000e+00> : vector<16x8xf32>
    %89 = tpu.matmul %88, %73, %cst_30 {dimension_numbers = #tpu.dot_dimension_numbers<[1], [0], [0], [1], [0, 0, 1, 1], [], []>} : vector<16x16xbf16>, vector<16x8xbf16>, vector<16x8xf32> -> vector<16x8xf32>
    %90 = tpu.concatenate %32, %51, %70, %89 in 1 : vector<16x8xf32>, vector<16x8xf32>, vector<16x8xf32>, vector<16x8xf32> -> vector<16x32xf32>
    %c0_31 = arith.constant 0 : index
    %c32 = arith.constant 32 : index
    %c0_32 = arith.constant 0 : index
    %91 = vector.load %arg3[%c0_31, %c32, %c0_32] : memref<2x224x128xbf16, #tpu.memory_space<vmem>>, vector<1x32x128xbf16>
    %92 = vector.shape_cast %91 : vector<1x32x128xbf16> to vector<32x128xbf16>
    %93 = arith.truncf %90 : vector<16x32xf32> to vector<16x32xbf16>
    %cst_33 = arith.constant dense<0.000000e+00> : vector<16x128xf32>
    %94 = tpu.matmul %93, %92, %cst_33 {dimension_numbers = #tpu.dot_dimension_numbers<[1], [0], [0], [1], [0, 0, 1, 1], [], []>} : vector<16x32xbf16>, vector<32x128xbf16>, vector<16x128xf32> -> vector<16x128xf32>
    %95 = vector.extract_strided_slice %5 {offsets = [1, 0], sizes = [1, 128], strides = [1, 1]} : vector<8x128xf32> to vector<1x128xf32>
    %96 = vector.broadcast %95 : vector<1x128xf32> to vector<16x128xf32>
    %97 = arith.addf %94, %96 : vector<16x128xf32>
    %98 = vector.extract_strided_slice %97 {offsets = [0, 0], sizes = [16, 32], strides = [1, 1]} : vector<16x128xf32> to vector<16x32xf32>
    %99 = arith.addf %2, %98 : vector<16x32xf32>
    %100 = vector.extract_strided_slice %5 {offsets = [4, 0], sizes = [1, 32], strides = [1, 1]} : vector<8x128xf32> to vector<1x32xf32>
    %101 = vector.extract_strided_slice %5 {offsets = [5, 0], sizes = [1, 32], strides = [1, 1]} : vector<8x128xf32> to vector<1x32xf32>
    %cst_34 = arith.constant dense<0.000000e+00> : vector<16xf32>
    %102 = vector.multi_reduction <add>, %99, %cst_34 [1] : vector<16x32xf32> to vector<16xf32>
    %103 = vector.shape_cast %102 : vector<16xf32> to vector<16x1xf32>
    %cst_35 = arith.constant 3.200000e+01 : f32
    %104 = vector.broadcast %cst_35 : f32 to vector<16x1xf32>
    %105 = arith.divf %103, %104 : vector<16x1xf32>
    %106 = vector.broadcast %105 : vector<16x1xf32> to vector<16x32xf32>
    %107 = arith.subf %99, %106 : vector<16x32xf32>
    %108 = arith.mulf %107, %107 : vector<16x32xf32>
    %cst_36 = arith.constant dense<0.000000e+00> : vector<16xf32>
    %109 = vector.multi_reduction <add>, %108, %cst_36 [1] : vector<16x32xf32> to vector<16xf32>
    %110 = vector.shape_cast %109 : vector<16xf32> to vector<16x1xf32>
    %cst_37 = arith.constant 3.200000e+01 : f32
    %111 = vector.broadcast %cst_37 : f32 to vector<16x1xf32>
    %112 = arith.divf %110, %111 : vector<16x1xf32>
    %113 = vector.broadcast %105 : vector<16x1xf32> to vector<16x32xf32>
    %114 = arith.subf %99, %113 : vector<16x32xf32>
    %cst_38 = arith.constant 9.99999974E-6 : f32
    %115 = vector.broadcast %cst_38 : f32 to vector<16x1xf32>
    %116 = arith.addf %112, %115 : vector<16x1xf32>
    %117 = math.rsqrt %116 : vector<16x1xf32>
    %118 = vector.broadcast %117 : vector<16x1xf32> to vector<16x32xf32>
    %119 = arith.mulf %114, %118 : vector<16x32xf32>
    %120 = vector.broadcast %100 : vector<1x32xf32> to vector<16x32xf32>
    %121 = arith.mulf %119, %120 : vector<16x32xf32>
    %122 = vector.broadcast %101 : vector<1x32xf32> to vector<16x32xf32>
    %123 = arith.addf %121, %122 : vector<16x32xf32>
    %c0_39 = arith.constant 0 : index
    %c64 = arith.constant 64 : index
    %c0_40 = arith.constant 0 : index
    %124 = vector.load %arg3[%c0_39, %c64, %c0_40] : memref<2x224x128xbf16, #tpu.memory_space<vmem>>, vector<1x32x128xbf16>
    %125 = vector.shape_cast %124 : vector<1x32x128xbf16> to vector<32x128xbf16>
    %126 = arith.truncf %123 : vector<16x32xf32> to vector<16x32xbf16>
    %cst_41 = arith.constant dense<0.000000e+00> : vector<16x128xf32>
    %127 = tpu.matmul %126, %125, %cst_41 {dimension_numbers = #tpu.dot_dimension_numbers<[1], [0], [0], [1], [0, 0, 1, 1], [], []>} : vector<16x32xbf16>, vector<32x128xbf16>, vector<16x128xf32> -> vector<16x128xf32>
    %128 = vector.extract_strided_slice %5 {offsets = [2, 0], sizes = [1, 128], strides = [1, 1]} : vector<8x128xf32> to vector<1x128xf32>
    %129 = vector.broadcast %128 : vector<1x128xf32> to vector<16x128xf32>
    %130 = arith.addf %127, %129 : vector<16x128xf32>
    %cst_42 = arith.constant 0.000000e+00 : f32
    %131 = vector.broadcast %cst_42 : f32 to vector<16x128xf32>
    %132 = arith.maximumf %130, %131 : vector<16x128xf32>
    %c0_43 = arith.constant 0 : index
    %c96 = arith.constant 96 : index
    %c0_44 = arith.constant 0 : index
    %133 = vector.load %arg3[%c0_43, %c96, %c0_44] : memref<2x224x128xbf16, #tpu.memory_space<vmem>>, vector<1x128x128xbf16>
    %134 = vector.shape_cast %133 : vector<1x128x128xbf16> to vector<128x128xbf16>
    %135 = arith.truncf %132 : vector<16x128xf32> to vector<16x128xbf16>
    %cst_45 = arith.constant dense<0.000000e+00> : vector<16x128xf32>
    %136 = tpu.matmul %135, %134, %cst_45 {dimension_numbers = #tpu.dot_dimension_numbers<[1], [0], [0], [1], [0, 0, 1, 1], [], []>} : vector<16x128xbf16>, vector<128x128xbf16>, vector<16x128xf32> -> vector<16x128xf32>
    %137 = vector.extract_strided_slice %5 {offsets = [3, 0], sizes = [1, 128], strides = [1, 1]} : vector<8x128xf32> to vector<1x128xf32>
    %138 = vector.broadcast %137 : vector<1x128xf32> to vector<16x128xf32>
    %139 = arith.addf %136, %138 : vector<16x128xf32>
    %140 = vector.extract_strided_slice %139 {offsets = [0, 0], sizes = [16, 32], strides = [1, 1]} : vector<16x128xf32> to vector<16x32xf32>
    %141 = arith.addf %123, %140 : vector<16x32xf32>
    %142 = vector.extract_strided_slice %5 {offsets = [6, 0], sizes = [1, 32], strides = [1, 1]} : vector<8x128xf32> to vector<1x32xf32>
    %143 = vector.extract_strided_slice %5 {offsets = [7, 0], sizes = [1, 32], strides = [1, 1]} : vector<8x128xf32> to vector<1x32xf32>
    %cst_46 = arith.constant dense<0.000000e+00> : vector<16xf32>
    %144 = vector.multi_reduction <add>, %141, %cst_46 [1] : vector<16x32xf32> to vector<16xf32>
    %145 = vector.shape_cast %144 : vector<16xf32> to vector<16x1xf32>
    %cst_47 = arith.constant 3.200000e+01 : f32
    %146 = vector.broadcast %cst_47 : f32 to vector<16x1xf32>
    %147 = arith.divf %145, %146 : vector<16x1xf32>
    %148 = vector.broadcast %147 : vector<16x1xf32> to vector<16x32xf32>
    %149 = arith.subf %141, %148 : vector<16x32xf32>
    %150 = arith.mulf %149, %149 : vector<16x32xf32>
    %cst_48 = arith.constant dense<0.000000e+00> : vector<16xf32>
    %151 = vector.multi_reduction <add>, %150, %cst_48 [1] : vector<16x32xf32> to vector<16xf32>
    %152 = vector.shape_cast %151 : vector<16xf32> to vector<16x1xf32>
    %cst_49 = arith.constant 3.200000e+01 : f32
    %153 = vector.broadcast %cst_49 : f32 to vector<16x1xf32>
    %154 = arith.divf %152, %153 : vector<16x1xf32>
    %155 = vector.broadcast %147 : vector<16x1xf32> to vector<16x32xf32>
    %156 = arith.subf %141, %155 : vector<16x32xf32>
    %cst_50 = arith.constant 9.99999974E-6 : f32
    %157 = vector.broadcast %cst_50 : f32 to vector<16x1xf32>
    %158 = arith.addf %154, %157 : vector<16x1xf32>
    %159 = math.rsqrt %158 : vector<16x1xf32>
    %160 = vector.broadcast %159 : vector<16x1xf32> to vector<16x32xf32>
    %161 = arith.mulf %156, %160 : vector<16x32xf32>
    %162 = vector.broadcast %142 : vector<1x32xf32> to vector<16x32xf32>
    %163 = arith.mulf %161, %162 : vector<16x32xf32>
    %164 = vector.broadcast %143 : vector<1x32xf32> to vector<16x32xf32>
    %165 = arith.addf %163, %164 : vector<16x32xf32>
    %c1 = arith.constant 1 : index
    %c0_51 = arith.constant 0 : index
    %c0_52 = arith.constant 0 : index
    %166 = vector.load %arg4[%c1, %c0_51, %c0_52] : memref<2x8x128xf32, #tpu.memory_space<vmem>>, vector<1x8x128xf32>
    %167 = vector.shape_cast %166 : vector<1x8x128xf32> to vector<8x128xf32>
    %c1_53 = arith.constant 1 : index
    %c0_54 = arith.constant 0 : index
    %c0_55 = arith.constant 0 : index
    %168 = vector.load %arg3[%c1_53, %c0_54, %c0_55] : memref<2x224x128xbf16, #tpu.memory_space<vmem>>, vector<1x32x128xbf16>
    %169 = vector.shape_cast %168 : vector<1x32x128xbf16> to vector<32x128xbf16>
    %170 = arith.truncf %165 : vector<16x32xf32> to vector<16x32xbf16>
    %cst_56 = arith.constant dense<0.000000e+00> : vector<16x128xf32>
    %171 = tpu.matmul %170, %169, %cst_56 {dimension_numbers = #tpu.dot_dimension_numbers<[1], [0], [0], [1], [0, 0, 1, 1], [], []>} : vector<16x32xbf16>, vector<32x128xbf16>, vector<16x128xf32> -> vector<16x128xf32>
    %172 = vector.extract_strided_slice %167 {offsets = [0, 0], sizes = [1, 128], strides = [1, 1]} : vector<8x128xf32> to vector<1x128xf32>
    %173 = vector.broadcast %172 : vector<1x128xf32> to vector<16x128xf32>
    %174 = arith.addf %171, %173 : vector<16x128xf32>
    %175 = arith.truncf %174 : vector<16x128xf32> to vector<16x128xbf16>
    %176 = vector.extract_strided_slice %175 {offsets = [0, 0], sizes = [16, 8], strides = [1, 1]} : vector<16x128xbf16> to vector<16x8xbf16>
    %177 = vector.extract_strided_slice %175 {offsets = [0, 32], sizes = [16, 8], strides = [1, 1]} : vector<16x128xbf16> to vector<16x8xbf16>
    %178 = vector.extract_strided_slice %175 {offsets = [0, 64], sizes = [16, 8], strides = [1, 1]} : vector<16x128xbf16> to vector<16x8xbf16>
    %cst_57 = arith.constant dense<0.000000e+00> : vector<16x16xf32>
    %179 = tpu.matmul %176, %177, %cst_57 {dimension_numbers = #tpu.dot_dimension_numbers<[1], [1], [0], [0], [0, 0, 1, 0], [], []>} : vector<16x8xbf16>, vector<16x8xbf16>, vector<16x16xf32> -> vector<16x16xf32>
    %cst_58 = arith.constant 0.353553385 : f32
    %180 = vector.broadcast %cst_58 : f32 to vector<16x16xf32>
    %181 = arith.mulf %179, %180 : vector<16x16xf32>
    %182 = arith.addf %181, %3 : vector<16x16xf32>
    %cst_59 = arith.constant dense<0xFF800000> : vector<16xf32>
    %183 = vector.multi_reduction <maximumf>, %182, %cst_59 [1] : vector<16x16xf32> to vector<16xf32>
    %184 = vector.shape_cast %183 : vector<16xf32> to vector<16x1xf32>
    %185 = vector.broadcast %184 : vector<16x1xf32> to vector<16x16xf32>
    %186 = arith.subf %182, %185 : vector<16x16xf32>
    %187 = math.exp %186 : vector<16x16xf32>
    %cst_60 = arith.constant dense<0.000000e+00> : vector<16xf32>
    %188 = vector.multi_reduction <add>, %187, %cst_60 [1] : vector<16x16xf32> to vector<16xf32>
    %189 = vector.shape_cast %188 : vector<16xf32> to vector<16x1xf32>
    %190 = tpu.reciprocal %189 {approx = true} : vector<16x1xf32> -> vector<16x1xf32>
    %191 = vector.broadcast %190 : vector<16x1xf32> to vector<16x16xf32>
    %192 = arith.mulf %187, %191 : vector<16x16xf32>
    %193 = arith.truncf %192 : vector<16x16xf32> to vector<16x16xbf16>
    %cst_61 = arith.constant dense<0.000000e+00> : vector<16x8xf32>
    %194 = tpu.matmul %193, %178, %cst_61 {dimension_numbers = #tpu.dot_dimension_numbers<[1], [0], [0], [1], [0, 0, 1, 1], [], []>} : vector<16x16xbf16>, vector<16x8xbf16>, vector<16x8xf32> -> vector<16x8xf32>
    %195 = vector.extract_strided_slice %175 {offsets = [0, 8], sizes = [16, 8], strides = [1, 1]} : vector<16x128xbf16> to vector<16x8xbf16>
    %196 = vector.extract_strided_slice %175 {offsets = [0, 40], sizes = [16, 8], strides = [1, 1]} : vector<16x128xbf16> to vector<16x8xbf16>
    %197 = vector.extract_strided_slice %175 {offsets = [0, 72], sizes = [16, 8], strides = [1, 1]} : vector<16x128xbf16> to vector<16x8xbf16>
    %cst_62 = arith.constant dense<0.000000e+00> : vector<16x16xf32>
    %198 = tpu.matmul %195, %196, %cst_62 {dimension_numbers = #tpu.dot_dimension_numbers<[1], [1], [0], [0], [0, 0, 1, 0], [], []>} : vector<16x8xbf16>, vector<16x8xbf16>, vector<16x16xf32> -> vector<16x16xf32>
    %cst_63 = arith.constant 0.353553385 : f32
    %199 = vector.broadcast %cst_63 : f32 to vector<16x16xf32>
    %200 = arith.mulf %198, %199 : vector<16x16xf32>
    %201 = arith.addf %200, %3 : vector<16x16xf32>
    %cst_64 = arith.constant dense<0xFF800000> : vector<16xf32>
    %202 = vector.multi_reduction <maximumf>, %201, %cst_64 [1] : vector<16x16xf32> to vector<16xf32>
    %203 = vector.shape_cast %202 : vector<16xf32> to vector<16x1xf32>
    %204 = vector.broadcast %203 : vector<16x1xf32> to vector<16x16xf32>
    %205 = arith.subf %201, %204 : vector<16x16xf32>
    %206 = math.exp %205 : vector<16x16xf32>
    %cst_65 = arith.constant dense<0.000000e+00> : vector<16xf32>
    %207 = vector.multi_reduction <add>, %206, %cst_65 [1] : vector<16x16xf32> to vector<16xf32>
    %208 = vector.shape_cast %207 : vector<16xf32> to vector<16x1xf32>
    %209 = tpu.reciprocal %208 {approx = true} : vector<16x1xf32> -> vector<16x1xf32>
    %210 = vector.broadcast %209 : vector<16x1xf32> to vector<16x16xf32>
    %211 = arith.mulf %206, %210 : vector<16x16xf32>
    %212 = arith.truncf %211 : vector<16x16xf32> to vector<16x16xbf16>
    %cst_66 = arith.constant dense<0.000000e+00> : vector<16x8xf32>
    %213 = tpu.matmul %212, %197, %cst_66 {dimension_numbers = #tpu.dot_dimension_numbers<[1], [0], [0], [1], [0, 0, 1, 1], [], []>} : vector<16x16xbf16>, vector<16x8xbf16>, vector<16x8xf32> -> vector<16x8xf32>
    %214 = vector.extract_strided_slice %175 {offsets = [0, 16], sizes = [16, 8], strides = [1, 1]} : vector<16x128xbf16> to vector<16x8xbf16>
    %215 = vector.extract_strided_slice %175 {offsets = [0, 48], sizes = [16, 8], strides = [1, 1]} : vector<16x128xbf16> to vector<16x8xbf16>
    %216 = vector.extract_strided_slice %175 {offsets = [0, 80], sizes = [16, 8], strides = [1, 1]} : vector<16x128xbf16> to vector<16x8xbf16>
    %cst_67 = arith.constant dense<0.000000e+00> : vector<16x16xf32>
    %217 = tpu.matmul %214, %215, %cst_67 {dimension_numbers = #tpu.dot_dimension_numbers<[1], [1], [0], [0], [0, 0, 1, 0], [], []>} : vector<16x8xbf16>, vector<16x8xbf16>, vector<16x16xf32> -> vector<16x16xf32>
    %cst_68 = arith.constant 0.353553385 : f32
    %218 = vector.broadcast %cst_68 : f32 to vector<16x16xf32>
    %219 = arith.mulf %217, %218 : vector<16x16xf32>
    %220 = arith.addf %219, %3 : vector<16x16xf32>
    %cst_69 = arith.constant dense<0xFF800000> : vector<16xf32>
    %221 = vector.multi_reduction <maximumf>, %220, %cst_69 [1] : vector<16x16xf32> to vector<16xf32>
    %222 = vector.shape_cast %221 : vector<16xf32> to vector<16x1xf32>
    %223 = vector.broadcast %222 : vector<16x1xf32> to vector<16x16xf32>
    %224 = arith.subf %220, %223 : vector<16x16xf32>
    %225 = math.exp %224 : vector<16x16xf32>
    %cst_70 = arith.constant dense<0.000000e+00> : vector<16xf32>
    %226 = vector.multi_reduction <add>, %225, %cst_70 [1] : vector<16x16xf32> to vector<16xf32>
    %227 = vector.shape_cast %226 : vector<16xf32> to vector<16x1xf32>
    %228 = tpu.reciprocal %227 {approx = true} : vector<16x1xf32> -> vector<16x1xf32>
    %229 = vector.broadcast %228 : vector<16x1xf32> to vector<16x16xf32>
    %230 = arith.mulf %225, %229 : vector<16x16xf32>
    %231 = arith.truncf %230 : vector<16x16xf32> to vector<16x16xbf16>
    %cst_71 = arith.constant dense<0.000000e+00> : vector<16x8xf32>
    %232 = tpu.matmul %231, %216, %cst_71 {dimension_numbers = #tpu.dot_dimension_numbers<[1], [0], [0], [1], [0, 0, 1, 1], [], []>} : vector<16x16xbf16>, vector<16x8xbf16>, vector<16x8xf32> -> vector<16x8xf32>
    %233 = vector.extract_strided_slice %175 {offsets = [0, 24], sizes = [16, 8], strides = [1, 1]} : vector<16x128xbf16> to vector<16x8xbf16>
    %234 = vector.extract_strided_slice %175 {offsets = [0, 56], sizes = [16, 8], strides = [1, 1]} : vector<16x128xbf16> to vector<16x8xbf16>
    %235 = vector.extract_strided_slice %175 {offsets = [0, 88], sizes = [16, 8], strides = [1, 1]} : vector<16x128xbf16> to vector<16x8xbf16>
    %cst_72 = arith.constant dense<0.000000e+00> : vector<16x16xf32>
    %236 = tpu.matmul %233, %234, %cst_72 {dimension_numbers = #tpu.dot_dimension_numbers<[1], [1], [0], [0], [0, 0, 1, 0], [], []>} : vector<16x8xbf16>, vector<16x8xbf16>, vector<16x16xf32> -> vector<16x16xf32>
    %cst_73 = arith.constant 0.353553385 : f32
    %237 = vector.broadcast %cst_73 : f32 to vector<16x16xf32>
    %238 = arith.mulf %236, %237 : vector<16x16xf32>
    %239 = arith.addf %238, %3 : vector<16x16xf32>
    %cst_74 = arith.constant dense<0xFF800000> : vector<16xf32>
    %240 = vector.multi_reduction <maximumf>, %239, %cst_74 [1] : vector<16x16xf32> to vector<16xf32>
    %241 = vector.shape_cast %240 : vector<16xf32> to vector<16x1xf32>
    %242 = vector.broadcast %241 : vector<16x1xf32> to vector<16x16xf32>
    %243 = arith.subf %239, %242 : vector<16x16xf32>
    %244 = math.exp %243 : vector<16x16xf32>
    %cst_75 = arith.constant dense<0.000000e+00> : vector<16xf32>
    %245 = vector.multi_reduction <add>, %244, %cst_75 [1] : vector<16x16xf32> to vector<16xf32>
    %246 = vector.shape_cast %245 : vector<16xf32> to vector<16x1xf32>
    %247 = tpu.reciprocal %246 {approx = true} : vector<16x1xf32> -> vector<16x1xf32>
    %248 = vector.broadcast %247 : vector<16x1xf32> to vector<16x16xf32>
    %249 = arith.mulf %244, %248 : vector<16x16xf32>
    %250 = arith.truncf %249 : vector<16x16xf32> to vector<16x16xbf16>
    %cst_76 = arith.constant dense<0.000000e+00> : vector<16x8xf32>
    %251 = tpu.matmul %250, %235, %cst_76 {dimension_numbers = #tpu.dot_dimension_numbers<[1], [0], [0], [1], [0, 0, 1, 1], [], []>} : vector<16x16xbf16>, vector<16x8xbf16>, vector<16x8xf32> -> vector<16x8xf32>
    %252 = tpu.concatenate %194, %213, %232, %251 in 1 : vector<16x8xf32>, vector<16x8xf32>, vector<16x8xf32>, vector<16x8xf32> -> vector<16x32xf32>
    %c1_77 = arith.constant 1 : index
    %c32_78 = arith.constant 32 : index
    %c0_79 = arith.constant 0 : index
    %253 = vector.load %arg3[%c1_77, %c32_78, %c0_79] : memref<2x224x128xbf16, #tpu.memory_space<vmem>>, vector<1x32x128xbf16>
    %254 = vector.shape_cast %253 : vector<1x32x128xbf16> to vector<32x128xbf16>
    %255 = arith.truncf %252 : vector<16x32xf32> to vector<16x32xbf16>
    %cst_80 = arith.constant dense<0.000000e+00> : vector<16x128xf32>
    %256 = tpu.matmul %255, %254, %cst_80 {dimension_numbers = #tpu.dot_dimension_numbers<[1], [0], [0], [1], [0, 0, 1, 1], [], []>} : vector<16x32xbf16>, vector<32x128xbf16>, vector<16x128xf32> -> vector<16x128xf32>
    %257 = vector.extract_strided_slice %167 {offsets = [1, 0], sizes = [1, 128], strides = [1, 1]} : vector<8x128xf32> to vector<1x128xf32>
    %258 = vector.broadcast %257 : vector<1x128xf32> to vector<16x128xf32>
    %259 = arith.addf %256, %258 : vector<16x128xf32>
    %260 = vector.extract_strided_slice %259 {offsets = [0, 0], sizes = [16, 32], strides = [1, 1]} : vector<16x128xf32> to vector<16x32xf32>
    %261 = arith.addf %165, %260 : vector<16x32xf32>
    %262 = vector.extract_strided_slice %167 {offsets = [4, 0], sizes = [1, 32], strides = [1, 1]} : vector<8x128xf32> to vector<1x32xf32>
    %263 = vector.extract_strided_slice %167 {offsets = [5, 0], sizes = [1, 32], strides = [1, 1]} : vector<8x128xf32> to vector<1x32xf32>
    %cst_81 = arith.constant dense<0.000000e+00> : vector<16xf32>
    %264 = vector.multi_reduction <add>, %261, %cst_81 [1] : vector<16x32xf32> to vector<16xf32>
    %265 = vector.shape_cast %264 : vector<16xf32> to vector<16x1xf32>
    %cst_82 = arith.constant 3.200000e+01 : f32
    %266 = vector.broadcast %cst_82 : f32 to vector<16x1xf32>
    %267 = arith.divf %265, %266 : vector<16x1xf32>
    %268 = vector.broadcast %267 : vector<16x1xf32> to vector<16x32xf32>
    %269 = arith.subf %261, %268 : vector<16x32xf32>
    %270 = arith.mulf %269, %269 : vector<16x32xf32>
    %cst_83 = arith.constant dense<0.000000e+00> : vector<16xf32>
    %271 = vector.multi_reduction <add>, %270, %cst_83 [1] : vector<16x32xf32> to vector<16xf32>
    %272 = vector.shape_cast %271 : vector<16xf32> to vector<16x1xf32>
    %cst_84 = arith.constant 3.200000e+01 : f32
    %273 = vector.broadcast %cst_84 : f32 to vector<16x1xf32>
    %274 = arith.divf %272, %273 : vector<16x1xf32>
    %275 = vector.broadcast %267 : vector<16x1xf32> to vector<16x32xf32>
    %276 = arith.subf %261, %275 : vector<16x32xf32>
    %cst_85 = arith.constant 9.99999974E-6 : f32
    %277 = vector.broadcast %cst_85 : f32 to vector<16x1xf32>
    %278 = arith.addf %274, %277 : vector<16x1xf32>
    %279 = math.rsqrt %278 : vector<16x1xf32>
    %280 = vector.broadcast %279 : vector<16x1xf32> to vector<16x32xf32>
    %281 = arith.mulf %276, %280 : vector<16x32xf32>
    %282 = vector.broadcast %262 : vector<1x32xf32> to vector<16x32xf32>
    %283 = arith.mulf %281, %282 : vector<16x32xf32>
    %284 = vector.broadcast %263 : vector<1x32xf32> to vector<16x32xf32>
    %285 = arith.addf %283, %284 : vector<16x32xf32>
    %c1_86 = arith.constant 1 : index
    %c64_87 = arith.constant 64 : index
    %c0_88 = arith.constant 0 : index
    %286 = vector.load %arg3[%c1_86, %c64_87, %c0_88] : memref<2x224x128xbf16, #tpu.memory_space<vmem>>, vector<1x32x128xbf16>
    %287 = vector.shape_cast %286 : vector<1x32x128xbf16> to vector<32x128xbf16>
    %288 = arith.truncf %285 : vector<16x32xf32> to vector<16x32xbf16>
    %cst_89 = arith.constant dense<0.000000e+00> : vector<16x128xf32>
    %289 = tpu.matmul %288, %287, %cst_89 {dimension_numbers = #tpu.dot_dimension_numbers<[1], [0], [0], [1], [0, 0, 1, 1], [], []>} : vector<16x32xbf16>, vector<32x128xbf16>, vector<16x128xf32> -> vector<16x128xf32>
    %290 = vector.extract_strided_slice %167 {offsets = [2, 0], sizes = [1, 128], strides = [1, 1]} : vector<8x128xf32> to vector<1x128xf32>
    %291 = vector.broadcast %290 : vector<1x128xf32> to vector<16x128xf32>
    %292 = arith.addf %289, %291 : vector<16x128xf32>
    %cst_90 = arith.constant 0.000000e+00 : f32
    %293 = vector.broadcast %cst_90 : f32 to vector<16x128xf32>
    %294 = arith.maximumf %292, %293 : vector<16x128xf32>
    %c1_91 = arith.constant 1 : index
    %c96_92 = arith.constant 96 : index
    %c0_93 = arith.constant 0 : index
    %295 = vector.load %arg3[%c1_91, %c96_92, %c0_93] : memref<2x224x128xbf16, #tpu.memory_space<vmem>>, vector<1x128x128xbf16>
    %296 = vector.shape_cast %295 : vector<1x128x128xbf16> to vector<128x128xbf16>
    %297 = arith.truncf %294 : vector<16x128xf32> to vector<16x128xbf16>
    %cst_94 = arith.constant dense<0.000000e+00> : vector<16x128xf32>
    %298 = tpu.matmul %297, %296, %cst_94 {dimension_numbers = #tpu.dot_dimension_numbers<[1], [0], [0], [1], [0, 0, 1, 1], [], []>} : vector<16x128xbf16>, vector<128x128xbf16>, vector<16x128xf32> -> vector<16x128xf32>
    %299 = vector.extract_strided_slice %167 {offsets = [3, 0], sizes = [1, 128], strides = [1, 1]} : vector<8x128xf32> to vector<1x128xf32>
    %300 = vector.broadcast %299 : vector<1x128xf32> to vector<16x128xf32>
    %301 = arith.addf %298, %300 : vector<16x128xf32>
    %302 = vector.extract_strided_slice %301 {offsets = [0, 0], sizes = [16, 32], strides = [1, 1]} : vector<16x128xf32> to vector<16x32xf32>
    %303 = arith.addf %285, %302 : vector<16x32xf32>
    %304 = vector.extract_strided_slice %167 {offsets = [6, 0], sizes = [1, 32], strides = [1, 1]} : vector<8x128xf32> to vector<1x32xf32>
    %305 = vector.extract_strided_slice %167 {offsets = [7, 0], sizes = [1, 32], strides = [1, 1]} : vector<8x128xf32> to vector<1x32xf32>
    %cst_95 = arith.constant dense<0.000000e+00> : vector<16xf32>
    %306 = vector.multi_reduction <add>, %303, %cst_95 [1] : vector<16x32xf32> to vector<16xf32>
    %307 = vector.shape_cast %306 : vector<16xf32> to vector<16x1xf32>
    %cst_96 = arith.constant 3.200000e+01 : f32
    %308 = vector.broadcast %cst_96 : f32 to vector<16x1xf32>
    %309 = arith.divf %307, %308 : vector<16x1xf32>
    %310 = vector.broadcast %309 : vector<16x1xf32> to vector<16x32xf32>
    %311 = arith.subf %303, %310 : vector<16x32xf32>
    %312 = arith.mulf %311, %311 : vector<16x32xf32>
    %cst_97 = arith.constant dense<0.000000e+00> : vector<16xf32>
    %313 = vector.multi_reduction <add>, %312, %cst_97 [1] : vector<16x32xf32> to vector<16xf32>
    %314 = vector.shape_cast %313 : vector<16xf32> to vector<16x1xf32>
    %cst_98 = arith.constant 3.200000e+01 : f32
    %315 = vector.broadcast %cst_98 : f32 to vector<16x1xf32>
    %316 = arith.divf %314, %315 : vector<16x1xf32>
    %317 = vector.broadcast %309 : vector<16x1xf32> to vector<16x32xf32>
    %318 = arith.subf %303, %317 : vector<16x32xf32>
    %cst_99 = arith.constant 9.99999974E-6 : f32
    %319 = vector.broadcast %cst_99 : f32 to vector<16x1xf32>
    %320 = arith.addf %316, %319 : vector<16x1xf32>
    %321 = math.rsqrt %320 : vector<16x1xf32>
    %322 = vector.broadcast %321 : vector<16x1xf32> to vector<16x32xf32>
    %323 = arith.mulf %318, %322 : vector<16x32xf32>
    %324 = vector.broadcast %304 : vector<1x32xf32> to vector<16x32xf32>
    %325 = arith.mulf %323, %324 : vector<16x32xf32>
    %326 = vector.broadcast %305 : vector<1x32xf32> to vector<16x32xf32>
    %327 = arith.addf %325, %326 : vector<16x32xf32>
    %c0_100 = arith.constant 0 : index
    %c0_101 = arith.constant 0 : index
    %328 = vector.load %arg5[%c0_100, %c0_101] : memref<160x128xbf16, #tpu.memory_space<vmem>>, vector<32x128xbf16>
    %329 = arith.truncf %327 : vector<16x32xf32> to vector<16x32xbf16>
    %cst_102 = arith.constant dense<0.000000e+00> : vector<16x128xf32>
    %330 = tpu.matmul %329, %328, %cst_102 {dimension_numbers = #tpu.dot_dimension_numbers<[1], [0], [0], [1], [0, 0, 1, 1], [], []>} : vector<16x32xbf16>, vector<32x128xbf16>, vector<16x128xf32> -> vector<16x128xf32>
    %c0_103 = arith.constant 0 : index
    %c0_104 = arith.constant 0 : index
    %331 = vector.load %arg6[%c0_103, %c0_104] : memref<2x128xf32, #tpu.memory_space<vmem>>, vector<1x128xf32>
    %332 = vector.broadcast %331 : vector<1x128xf32> to vector<16x128xf32>
    %333 = arith.addf %330, %332 : vector<16x128xf32>
    %cst_105 = arith.constant 0.000000e+00 : f32
    %334 = vector.broadcast %cst_105 : f32 to vector<16x128xf32>
    %335 = arith.maximumf %333, %334 : vector<16x128xf32>
    %c32_106 = arith.constant 32 : index
    %c0_107 = arith.constant 0 : index
    %336 = vector.load %arg5[%c32_106, %c0_107] : memref<160x128xbf16, #tpu.memory_space<vmem>>, vector<128x128xbf16>
    %337 = arith.truncf %335 : vector<16x128xf32> to vector<16x128xbf16>
    %cst_108 = arith.constant dense<0.000000e+00> : vector<16x128xf32>
    %338 = tpu.matmul %337, %336, %cst_108 {dimension_numbers = #tpu.dot_dimension_numbers<[1], [0], [0], [1], [0, 0, 1, 1], [], []>} : vector<16x128xbf16>, vector<128x128xbf16>, vector<16x128xf32> -> vector<16x128xf32>
    %c1_109 = arith.constant 1 : index
    %c0_110 = arith.constant 0 : index
    %339 = vector.load %arg6[%c1_109, %c0_110] : memref<2x128xf32, #tpu.memory_space<vmem>>, vector<1x128xf32>
    %340 = vector.broadcast %339 : vector<1x128xf32> to vector<16x128xf32>
    %341 = arith.addf %338, %340 : vector<16x128xf32>
    %cst_111 = arith.constant dense<0xFF800000> : vector<16xf32>
    %342 = vector.multi_reduction <maximumf>, %341, %cst_111 [1] : vector<16x128xf32> to vector<16xf32>
    %343 = vector.shape_cast %342 : vector<16xf32> to vector<16x1xf32>
    %344 = vector.broadcast %343 : vector<16x1xf32> to vector<16x128xf32>
    %345 = arith.subf %341, %344 : vector<16x128xf32>
    %346 = math.exp %345 : vector<16x128xf32>
    %cst_112 = arith.constant dense<0.000000e+00> : vector<16xf32>
    %347 = vector.multi_reduction <add>, %346, %cst_112 [1] : vector<16x128xf32> to vector<16xf32>
    %348 = vector.shape_cast %347 : vector<16xf32> to vector<16x1xf32>
    %349 = math.log %348 : vector<16x1xf32>
    %350 = arith.addf %349, %343 : vector<16x1xf32>
    %351 = vector.broadcast %350 : vector<16x1xf32> to vector<16x128xf32>
    %352 = arith.subf %341, %351 : vector<16x128xf32>
    %c0_113 = arith.constant 0 : index
    %c0_114 = arith.constant 0 : index
    %353 = vector.load %arg7[%c0_113, %c0_114] : memref<16x128xf32, #tpu.memory_space<vmem>>, vector<16x128xf32>
    tpu.vector_store %arg7[%c0_113, %c0_114], %352 {strides = array<i32>} : memref<16x128xf32, #tpu.memory_space<vmem>>, vector<16x128xf32>,
    return
  }
}

</mosaic_0001>

<llo_original>
// kernel: transformer_decoder_forward.1
$region0: #{transformer_decoder_forward.1}
  #allocation0 [shape = 'u32[]', space=smem, size = 0x4, offset = 0x4, fixed_abs, tag = 'smem constant byte address 0x4 - core index']
  #allocation1 [shape = 'u32[144,128]{1,0:T(1,128)}', space=vmem, size = 0x12000, scoped, tag = 'internal scratch']
  %s0 = inlined_call_operand.vmem [shape: f32[16,32], index: 0, kind: input, shape index: {}]
  %s1 = inlined_call_operand.vmem [shape: f32[16,32], index: 1, kind: input, shape index: {}]
  %s2 = inlined_call_operand.vmem [shape: f32[16,16], index: 2, kind: input, shape index: {}]
  %s3 = inlined_call_operand.hbm [shape: bf16[2,224,128], index: 3, kind: input, shape index: {}]
  %s4 = inlined_call_operand.vmem [shape: f32[2,8,128], index: 4, kind: input, shape index: {}]
  %s5 = inlined_call_operand.vmem [shape: bf16[160,128], index: 5, kind: input, shape index: {}]
  %s6 = inlined_call_operand.vmem [shape: f32[2,128], index: 6, kind: input, shape index: {}]
  %s7 = inlined_call_operand.vmem [shape: f32[16,128], index: 7, kind: output, shape index: {}]
  %s8 = sld [smem:[#allocation0]]
  $region42: #{transformer_decoder_forward.1} parent=0
    _
  %s10 = ssub.s32 1, %s8
  %s11 = scalar_select 0, %s10, %s8
  $region1: #{transformer_decoder_forward.1} parent=0
    #allocation2 [shape = 'u8[114688]{0}', space=vmem, size = 0x1c000, scoped, tag = 'input window, operand 3, single buffered']
    #allocation3 [shape = 's32[1]{0}', space=sflag, size = 0x4, scoped, tag = 'scoped memory for transformer_decoder_forward.1']
    %12 = vsyncpa [#allocation3], 0
    // Predicated region
    $region2: #{transformer_decoder_forward.1} parent=1 // pred_check
      _
    $region3: #{transformer_decoder_forward.1} parent=1 // pred_check_branch
      %14 = sbr.rel (0) target = $region5
    $region4: #{transformer_decoder_forward.1} parent=1 // pred_region
      _
    $region5: #{transformer_decoder_forward.1} parent=1 // pred_fallthru
      _
    // Predicated region
    $region6: #{transformer_decoder_forward.1} parent=1 // pred_check
      _
    $region7: #{transformer_decoder_forward.1} parent=1 // pred_check_branch
      %16 = sbr.rel (0) target = $region9
    $region8: #{transformer_decoder_forward.1} parent=1 // pred_region
      _
    $region9: #{transformer_decoder_forward.1} parent=1 // pred_fallthru
      _
    // Predicated region
    $region10: #{transformer_decoder_forward.1} parent=1 // pred_check
      _
    $region11: #{transformer_decoder_forward.1} parent=1 // pred_check_branch
      %18 = sbr.rel (0) target = $region13
    $region12: #{transformer_decoder_forward.1} parent=1 // pred_region
      _
    $region13: #{transformer_decoder_forward.1} parent=1 // pred_fallthru
      _
    // Predicated region
    $region14: #{transformer_decoder_forward.1} parent=1 // pred_check
      _
    $region15: #{transformer_decoder_forward.1} parent=1 // pred_check_branch
      %20 = sbr.rel (0) target = $region17
    $region16: #{transformer_decoder_forward.1} parent=1 // pred_region
      %s22 = ssub.s32 3584, 3584
      %23 = vsyncadd [#allocation3], %s22
      %s24 = sshll.u32 [#allocation2], 4
      %s25 = int_to_ptr.vmem [resolvable:$true] %s24
      %30 = dma.hbm_to_vmem [thread:$0]  %s3, 3584, %s25, [#allocation3], 64, 64, 4
    $region17: #{transformer_decoder_forward.1} parent=1 // pred_fallthru
      _
    // Predicated region
    $region18: #{transformer_decoder_forward.1} parent=1 // pred_check
      _
    $region19: #{transformer_decoder_forward.1} parent=1 // pred_check_branch
      %32 = sbr.rel (0) target = $region21
    $region20: #{transformer_decoder_forward.1} parent=1 // pred_region
      _
    $region21: #{transformer_decoder_forward.1} parent=1 // pred_fallthru
      _
    // Predicated region
    $region22: #{transformer_decoder_forward.1} parent=1 // pred_check
      _
    $region23: #{transformer_decoder_forward.1} parent=1 // pred_check_branch
      %34 = sbr.rel (0) target = $region25
    $region24: #{transformer_decoder_forward.1} parent=1 // pred_region
      _
    $region25: #{transformer_decoder_forward.1} parent=1 // pred_fallthru
      _
    // Predicated region
    $region26: #{transformer_decoder_forward.1} parent=1 // pred_check
      _
    $region27: #{transformer_decoder_forward.1} parent=1 // pred_check_branch
      %36 = sbr.rel (0) target = $region29
    $region28: #{transformer_decoder_forward.1} parent=1 // pred_region
      _
    $region29: #{transformer_decoder_forward.1} parent=1 // pred_fallthru
      _
    // Predicated region
    $region30: #{transformer_decoder_forward.1} parent=1 // pred_check
      _
    $region31: #{transformer_decoder_forward.1} parent=1 // pred_check_branch
      %38 = sbr.rel (0) target = $region33
    $region32: #{transformer_decoder_forward.1} parent=1 // pred_region
      %39 = dma.done [#allocation3], 3584
    $region33: #{transformer_decoder_forward.1} parent=1 // pred_fallthru
      _
    %v41 = vld [vmem:[%s0] sm:$0xff]
    %v42 = vld [vmem:[%s0 + $0x8] sm:$0xff]
    %v43 = vld [vmem:[%s1] sm:$0xff]
    %v44 = vld [vmem:[%s1 + $0x8] sm:$0xff]
    %v45 = vadd.f32 %v41, %v43
    %v46 = vadd.f32 %v42, %v44
    %v47 = vld [vmem:[%s2] sm:$0xff]
    %v48 = vld [vmem:[%s2 + $0x8] sm:$0xff]
    %v49 = vld [vmem:[%s4] sm:$0xff]
    %v50 = vld [vmem:[#allocation2] sm:$0xf]
    %v51 = vld [vmem:[#allocation2 + $0x4] sm:$0xf]
    %v52 = vld [vmem:[#allocation2 + $0x8] sm:$0xf]
    %v53 = vld [vmem:[#allocation2 + $0xc] sm:$0xf]
    %v54 = vpack.c.bf16 %v46, %v45
    %v55 = vlaneseq
    %v56 = vshrl.u32 %v55, 7
    %v57 = vsub.s32 0, %v56
    %v58 = vrot.slane %v49, %v57
    %v63 = vunpack.c.l.b16 %v50
    %v64 = vunpack.c.l.b16 %v51
    %v65 = vunpack.c.l.b16 %v52
    %v66 = vunpack.c.l.b16 %v53
    %v67 = vpack.c.b16 %v64, %v63
    %v68 = vpack.c.b16 %v66, %v65
    %vm71 = vcmask 261120
    %v73 = vsel %vm71, %v54, 0
    %75 = vmatprep.subr.bf16.mxu0 0
    %76 = vmatpush1.bf16.msra.mxu0 0
    %77 = vmatprep.subr.bf16.mxu0 0
    %78 = vmatpush1.bf16.msra.mxu0 0
    %79 = vmatprep.subr.bf16.mxu0 0
    %80 = vmatpush1.bf16.msra.mxu0 0
    %81 = vmatprep.subr.bf16.mxu0 0
    %82 = vmatpush1.bf16.msra.mxu0 0
    %83 = vmatprep.subr.bf16.mxu0 0
    %84 = vmatpush1.bf16.msra.mxu0 0
    %85 = vmatprep.subr.bf16.mxu0 0
    %86 = vmatpush1.bf16.msra.mxu0 0
    %87 = vmatprep.subr.bf16.mxu0 0
    %88 = vmatpush1.bf16.msra.mxu0 %v68
    %89 = vmatprep.subr.bf16.mxu0 0
    %90 = vmatpush1.bf16.msra.mxu0 %v67
    %91 = vmatprep.subr.bf16.mxu0 0
    %92 = vmatpush2.bf16.msra.mxu0 0
    %93 = vmatprep.subr.bf16.mxu0 0
    %94 = vmatpush2.bf16.msra.mxu0 0
    %95 = vmatprep.subr.bf16.mxu0 0
    %96 = vmatpush2.bf16.msra.mxu0 0
    %97 = vmatprep.subr.bf16.mxu0 0
    %98 = vmatpush2.bf16.msra.mxu0 0
    %99 = vmatprep.subr.bf16.mxu0 0
    %100 = vmatpush2.bf16.msra.mxu0 0
    %101 = vmatprep.subr.bf16.mxu0 0
    %102 = vmatpush2.bf16.msra.mxu0 0
    %103 = vmatprep.subr.bf16.mxu0 0
    %104 = vmatpush2.bf16.msra.mxu0 0
    %105 = vmatprep.subr.bf16.mxu0 0
    %106 = vmatpush2.bf16.msra.mxu0 0
    %107 = vmatprep.mubr.bf16.mxu0 0
    %108 = vmatmul.mubr.bf16.gmra.mxu0 %v73
    %v109 = vpop.f32.mrf.mxu0
    %v110 = vadd.f32 %v58, %v109
    %v111 = vpop.f32.mrf.mxu0
    %v112 = vpop.f32.mrf.mxu0
    %v113 = vadd.f32 %v58, %v112
    %v114 = vpop.f32.mrf.mxu0
    %115 = vdwg.mxu0
    %v116 = vpack.c.bf16 %v113, %v110
    %118 = vrot.lane.b32.xlu0 %v116, 96
    %v119 = vpop.permute.xlu0 %118
    %vm120 = vcmask 64512
    %v122 = vsel %vm120, %v116, 0
    %v125 = vsel %vm120, %v119, 0
    %127 = vmatprep.subr.bf16.mxu0 0
    %128 = vmatpush1.bf16.xpose.msra.mxu0 0
    %129 = vmatprep.subr.bf16.mxu0 0
    %130 = vmatpush1.bf16.xpose.msra.mxu0 0
    %131 = vmatprep.subr.bf16.mxu0 0
    %132 = vmatpush1.bf16.xpose.msra.mxu0 0
    %133 = vmatprep.subr.bf16.mxu0 0
    %134 = vmatpush1.bf16.xpose.msra.mxu0 0
    %135 = vmatprep.subr.bf16.mxu0 0
    %136 = vmatpush1.bf16.xpose.msra.mxu0 0
    %137 = vmatprep.subr.bf16.mxu0 0
    %138 = vmatpush1.bf16.xpose.msra.mxu0 0
    %139 = vmatprep.subr.bf16.mxu0 0
    %140 = vmatpush1.bf16.xpose.msra.mxu0 0
    %141 = vmatprep.subr.bf16.mxu0 0
    %142 = vmatpush1.bf16.xpose.msra.mxu0 %v125
    %143 = vmatprep.subr.bf16.mxu0 0
    %144 = vmatpush2.bf16.xpose.msra.mxu0 0
    %145 = vmatprep.subr.bf16.mxu0 0
    %146 = vmatpush2.bf16.xpose.msra.mxu0 0
    %147 = vmatprep.subr.bf16.mxu0 0
    %148 = vmatpush2.bf16.xpose.msra.mxu0 0
    %149 = vmatprep.subr.bf16.mxu0 0
    %150 = vmatpush2.bf16.xpose.msra.mxu0 0
    %151 = vmatprep.subr.bf16.mxu0 0
    %152 = vmatpush2.bf16.xpose.msra.mxu0 0
    %153 = vmatprep.subr.bf16.mxu0 0
    %154 = vmatpush2.bf16.xpose.msra.mxu0 0
    %155 = vmatprep.subr.bf16.mxu0 0
    %156 = vmatpush2.bf16.xpose.msra.mxu0 0
    %157 = vmatprep.subr.bf16.mxu0 0
    %158 = vmatpush2.bf16.xpose.msra.mxu0 0
    %159 = vmatprep.mubr.bf16.mxu0 0
    %160 = vmatmul.mubr.bf16.gmra.mxu0 %v122
    %v161 = vpop.f32.mrf.mxu0
    %v162 = vadd.f32 0.0, %v161
    %v163 = vpop.f32.mrf.mxu0
    %v164 = vpop.f32.mrf.mxu0
    %v165 = vadd.f32 0.0, %v164
    %v166 = vpop.f32.mrf.mxu0
    %167 = vdwg.mxu0
    %v168 = vmul.f32 %v162, 0.35355338
    %v169 = vmul.f32 %v165, 0.35355338
    %v170 = vadd.f32 %v168, %v47
    %v171 = vadd.f32 %v169, %v48
    %vm172 = vcmask 130048
    %v173 = vsel %vm172, %v170, -inf
    %174 = vmax.xlane.f32.xlu0 %v173
    %v175 = vpop.xlane.xlu0 %174
    %v176 = vsel %vm172, %v171, -inf
    %177 = vmax.xlane.f32.xlu0 %v176
    %v178 = vpop.xlane.xlu0 %177
    %v179 = vsub.f32 %v170, %v175
    %v180 = vsub.f32 %v171, %v178
    %v181 = vmul.f32 %v179, 1.442695
    %v182 = vpow.pop %v181
    %v183 = vmul.f32 %v180, 1.442695
    %v184 = vpow.pop %v183
    %v185 = vsel %vm172, %v182, 0.0
    %186 = vadd.xlane.f32.xlu0 %v185
    %v187 = vpop.xlane.xlu0 %186
    %v188 = vsel %vm172, %v184, 0.0
    %189 = vadd.xlane.f32.xlu0 %v188
    %v190 = vpop.xlane.xlu0 %189
    %v191 = vrcp.pop %v187
    %v192 = vrcp.pop %v190
    %v193 = vmul.f32 %v182, %v191
    %v194 = vmul.f32 %v184, %v192
    %v195 = vpack.c.bf16 %v194, %v193
    %196 = vrot.lane.b32.xlu0 %v116, 64
    %v197 = vpop.permute.xlu0 %196
    %v200 = vsel %vm172, %v195, 0
    %202 = vmatprep.subr.bf16.mxu0 0
    %203 = vmatpush1.bf16.msra.mxu0 0
    %204 = vmatprep.subr.bf16.mxu0 0
    %205 = vmatpush1.bf16.msra.mxu0 0
    %206 = vmatprep.subr.bf16.mxu0 0
    %207 = vmatpush1.bf16.msra.mxu0 0
    %208 = vmatprep.subr.bf16.mxu0 0
    %209 = vmatpush1.bf16.msra.mxu0 0
    %210 = vmatprep.subr.bf16.mxu0 0
    %211 = vmatpush1.bf16.msra.mxu0 0
    %212 = vmatprep.subr.bf16.mxu0 0
    %213 = vmatpush1.bf16.msra.mxu0 0
    %214 = vmatprep.subr.bf16.mxu0 0
    %215 = vmatpush1.bf16.msra.mxu0 0
    %216 = vmatprep.subr.bf16.mxu0 0
    %217 = vmatpush1.bf16.msra.mxu0 %v197
    %218 = vmatprep.subr.bf16.mxu0 0
    %219 = vmatpush2.bf16.msra.mxu0 0
    %220 = vmatprep.subr.bf16.mxu0 0
    %221 = vmatpush2.bf16.msra.mxu0 0
    %222 = vmatprep.subr.bf16.mxu0 0
    %223 = vmatpush2.bf16.msra.mxu0 0
    %224 = vmatprep.subr.bf16.mxu0 0
    %225 = vmatpush2.bf16.msra.mxu0 0
    %226 = vmatprep.subr.bf16.mxu0 0
    %227 = vmatpush2.bf16.msra.mxu0 0
    %228 = vmatprep.subr.bf16.mxu0 0
    %229 = vmatpush2.bf16.msra.mxu0 0
    %230 = vmatprep.subr.bf16.mxu0 0
    %231 = vmatpush2.bf16.msra.mxu0 0
    %232 = vmatprep.subr.bf16.mxu0 0
    %233 = vmatpush2.bf16.msra.mxu0 0
    %234 = vmatprep.mubr.bf16.mxu0 0
    %235 = vmatmul.mubr.bf16.gmra.mxu0 %v200
    %v236 = vpop.f32.mrf.mxu0
    %v237 = vadd.f32 0.0, %v236
    %v238 = vpop.f32.mrf.mxu0
    %v239 = vpop.f32.mrf.mxu0
    %v240 = vadd.f32 0.0, %v239
    %v241 = vpop.f32.mrf.mxu0
    %242 = vdwg.mxu0
    %243 = vrot.lane.b32.xlu0 %v116, 120
    %v244 = vpop.permute.xlu0 %243
    %245 = vrot.lane.b32.xlu0 %v116, 88
    %v246 = vpop.permute.xlu0 %245
    %v248 = vsel %vm120, %v244, 0
    %v251 = vsel %vm120, %v246, 0
    %253 = vmatprep.subr.bf16.mxu0 0
    %254 = vmatpush1.bf16.xpose.msra.mxu0 0
    %255 = vmatprep.subr.bf16.mxu0 0
    %256 = vmatpush1.bf16.xpose.msra.mxu0 0
    %257 = vmatprep.subr.bf16.mxu0 0
    %258 = vmatpush1.bf16.xpose.msra.mxu0 0
    %259 = vmatprep.subr.bf16.mxu0 0
    %260 = vmatpush1.bf16.xpose.msra.mxu0 0
    %261 = vmatprep.subr.bf16.mxu0 0
    %262 = vmatpush1.bf16.xpose.msra.mxu0 0
    %263 = vmatprep.subr.bf16.mxu0 0
    %264 = vmatpush1.bf16.xpose.msra.mxu0 0
    %265 = vmatprep.subr.bf16.mxu0 0
    %266 = vmatpush1.bf16.xpose.msra.mxu0 0
    %267 = vmatprep.subr.bf16.mxu0 0
    %268 = vmatpush1.bf16.xpose.msra.mxu0 %v251
    %269 = vmatprep.subr.bf16.mxu0 0
    %270 = vmatpush2.bf16.xpose.msra.mxu0 0
    %271 = vmatprep.subr.bf16.mxu0 0
    %272 = vmatpush2.bf16.xpose.msra.mxu0 0
    %273 = vmatprep.subr.bf16.mxu0 0
    %274 = vmatpush2.bf16.xpose.msra.mxu0 0
    %275 = vmatprep.subr.bf16.mxu0 0
    %276 = vmatpush2.bf16.xpose.msra.mxu0 0
    %277 = vmatprep.subr.bf16.mxu0 0
    %278 = vmatpush2.bf16.xpose.msra.mxu0 0
    %279 = vmatprep.subr.bf16.mxu0 0
    %280 = vmatpush2.bf16.xpose.msra.mxu0 0
    %281 = vmatprep.subr.bf16.mxu0 0
    %282 = vmatpush2.bf16.xpose.msra.mxu0 0
    %283 = vmatprep.subr.bf16.mxu0 0
    %284 = vmatpush2.bf16.xpose.msra.mxu0 0
    %285 = vmatprep.mubr.bf16.mxu0 0
    %286 = vmatmul.mubr.bf16.gmra.mxu0 %v248
    %v287 = vpop.f32.mrf.mxu0
    %v288 = vadd.f32 0.0, %v287
    %v289 = vpop.f32.mrf.mxu0
    %v290 = vpop.f32.mrf.mxu0
    %v291 = vadd.f32 0.0, %v290
    %v292 = vpop.f32.mrf.mxu0
    %293 = vdwg.mxu0
    %v294 = vmul.f32 %v288, 0.35355338
    %v295 = vmul.f32 %v291, 0.35355338
    %v296 = vadd.f32 %v294, %v47
    %v297 = vadd.f32 %v295, %v48
    %v298 = vsel %vm172, %v296, -inf
    %299 = vmax.xlane.f32.xlu0 %v298
    %v300 = vpop.xlane.xlu0 %299
    %v301 = vsel %vm172, %v297, -inf
    %302 = vmax.xlane.f32.xlu0 %v301
    %v303 = vpop.xlane.xlu0 %302
    %v304 = vsub.f32 %v296, %v300
    %v305 = vsub.f32 %v297, %v303
    %v306 = vmul.f32 %v304, 1.442695
    %v307 = vpow.pop %v306
    %v308 = vmul.f32 %v305, 1.442695
    %v309 = vpow.pop %v308
    %v310 = vsel %vm172, %v307, 0.0
    %311 = vadd.xlane.f32.xlu0 %v310
    %v312 = vpop.xlane.xlu0 %311
    %v313 = vsel %vm172, %v309, 0.0
    %314 = vadd.xlane.f32.xlu0 %v313
    %v315 = vpop.xlane.xlu0 %314
    %v316 = vrcp.pop %v312
    %v317 = vrcp.pop %v315
    %v318 = vmul.f32 %v307, %v316
    %v319 = vmul.f32 %v309, %v317
    %v320 = vpack.c.bf16 %v319, %v318
    %321 = vrot.lane.b32.xlu0 %v116, 56
    %v322 = vpop.permute.xlu0 %321
    %v325 = vsel %vm172, %v320, 0
    %327 = vmatprep.subr.bf16.mxu0 0
    %328 = vmatpush1.bf16.msra.mxu0 0
    %329 = vmatprep.subr.bf16.mxu0 0
    %330 = vmatpush1.bf16.msra.mxu0 0
    %331 = vmatprep.subr.bf16.mxu0 0
    %332 = vmatpush1.bf16.msra.mxu0 0
    %333 = vmatprep.subr.bf16.mxu0 0
    %334 = vmatpush1.bf16.msra.mxu0 0
    %335 = vmatprep.subr.bf16.mxu0 0
    %336 = vmatpush1.bf16.msra.mxu0 0
    %337 = vmatprep.subr.bf16.mxu0 0
    %338 = vmatpush1.bf16.msra.mxu0 0
    %339 = vmatprep.subr.bf16.mxu0 0
    %340 = vmatpush1.bf16.msra.mxu0 0
    %341 = vmatprep.subr.bf16.mxu0 0
    %342 = vmatpush1.bf16.msra.mxu0 %v322
    %343 = vmatprep.subr.bf16.mxu0 0
    %344 = vmatpush2.bf16.msra.mxu0 0
    %345 = vmatprep.subr.bf16.mxu0 0
    %346 = vmatpush2.bf16.msra.mxu0 0
    %347 = vmatprep.subr.bf16.mxu0 0
    %348 = vmatpush2.bf16.msra.mxu0 0
    %349 = vmatprep.subr.bf16.mxu0 0
    %350 = vmatpush2.bf16.msra.mxu0 0
    %351 = vmatprep.subr.bf16.mxu0 0
    %352 = vmatpush2.bf16.msra.mxu0 0
    %353 = vmatprep.subr.bf16.mxu0 0
    %354 = vmatpush2.bf16.msra.mxu0 0
    %355 = vmatprep.subr.bf16.mxu0 0
    %356 = vmatpush2.bf16.msra.mxu0 0
    %357 = vmatprep.subr.bf16.mxu0 0
    %358 = vmatpush2.bf16.msra.mxu0 0
    %359 = vmatprep.mubr.bf16.mxu0 0
    %360 = vmatmul.mubr.bf16.gmra.mxu0 %v325
    %v361 = vpop.f32.mrf.mxu0
    %v362 = vadd.f32 0.0, %v361
    %v363 = vpop.f32.mrf.mxu0
    %v364 = vpop.f32.mrf.mxu0
    %v365 = vadd.f32 0.0, %v364
    %v366 = vpop.f32.mrf.mxu0
    %367 = vdwg.mxu0
    %368 = vrot.lane.b32.xlu0 %v116, 112
    %v369 = vpop.permute.xlu0 %368
    %370 = vrot.lane.b32.xlu0 %v116, 80
    %v371 = vpop.permute.xlu0 %370
    %v373 = vsel %vm120, %v369, 0
    %v376 = vsel %vm120, %v371, 0
    %378 = vmatprep.subr.bf16.mxu0 0
    %379 = vmatpush1.bf16.xpose.msra.mxu0 0
    %380 = vmatprep.subr.bf16.mxu0 0
    %381 = vmatpush1.bf16.xpose.msra.mxu0 0
    %382 = vmatprep.subr.bf16.mxu0 0
    %383 = vmatpush1.bf16.xpose.msra.mxu0 0
    %384 = vmatprep.subr.bf16.mxu0 0
    %385 = vmatpush1.bf16.xpose.msra.mxu0 0
    %386 = vmatprep.subr.bf16.mxu0 0
    %387 = vmatpush1.bf16.xpose.msra.mxu0 0
    %388 = vmatprep.subr.bf16.mxu0 0
    %389 = vmatpush1.bf16.xpose.msra.mxu0 0
    %390 = vmatprep.subr.bf16.mxu0 0
    %391 = vmatpush1.bf16.xpose.msra.mxu0 0
    %392 = vmatprep.subr.bf16.mxu0 0
    %393 = vmatpush1.bf16.xpose.msra.mxu0 %v376
    %394 = vmatprep.subr.bf16.mxu0 0
    %395 = vmatpush2.bf16.xpose.msra.mxu0 0
    %396 = vmatprep.subr.bf16.mxu0 0
    %397 = vmatpush2.bf16.xpose.msra.mxu0 0
    %398 = vmatprep.subr.bf16.mxu0 0
    %399 = vmatpush2.bf16.xpose.msra.mxu0 0
    %400 = vmatprep.subr.bf16.mxu0 0
    %401 = vmatpush2.bf16.xpose.msra.mxu0 0
    %402 = vmatprep.subr.bf16.mxu0 0
    %403 = vmatpush2.bf16.xpose.msra.mxu0 0
    %404 = vmatprep.subr.bf16.mxu0 0
    %405 = vmatpush2.bf16.xpose.msra.mxu0 0
    %406 = vmatprep.subr.bf16.mxu0 0
    %407 = vmatpush2.bf16.xpose.msra.mxu0 0
    %408 = vmatprep.subr.bf16.mxu0 0
    %409 = vmatpush2.bf16.xpose.msra.mxu0 0
    %410 = vmatprep.mubr.bf16.mxu0 0
    %411 = vmatmul.mubr.bf16.gmra.mxu0 %v373
    %v412 = vpop.f32.mrf.mxu0
    %v413 = vadd.f32 0.0, %v412
    %v414 = vpop.f32.mrf.mxu0
    %v415 = vpop.f32.mrf.mxu0
    %v416 = vadd.f32 0.0, %v415
    %v417 = vpop.f32.mrf.mxu0
    %418 = vdwg.mxu0
    %v419 = vmul.f32 %v413, 0.35355338
    %v420 = vmul.f32 %v416, 0.35355338
    %v421 = vadd.f32 %v419, %v47
    %v422 = vadd.f32 %v420, %v48
    %v423 = vsel %vm172, %v421, -inf
    %424 = vmax.xlane.f32.xlu0 %v423
    %v425 = vpop.xlane.xlu0 %424
    %v426 = vsel %vm172, %v422, -inf
    %427 = vmax.xlane.f32.xlu0 %v426
    %v428 = vpop.xlane.xlu0 %427
    %v429 = vsub.f32 %v421, %v425
    %v430 = vsub.f32 %v422, %v428
    %v431 = vmul.f32 %v429, 1.442695
    %v432 = vpow.pop %v431
    %v433 = vmul.f32 %v430, 1.442695
    %v434 = vpow.pop %v433
    %v435 = vsel %vm172, %v432, 0.0
    %436 = vadd.xlane.f32.xlu0 %v435
    %v437 = vpop.xlane.xlu0 %436
    %v438 = vsel %vm172, %v434, 0.0
    %439 = vadd.xlane.f32.xlu0 %v438
    %v440 = vpop.xlane.xlu0 %439
    %v441 = vrcp.pop %v437
    %v442 = vrcp.pop %v440
    %v443 = vmul.f32 %v432, %v441
    %v444 = vmul.f32 %v434, %v442
    %v445 = vpack.c.bf16 %v444, %v443
    %446 = vrot.lane.b32.xlu0 %v116, 48
    %v447 = vpop.permute.xlu0 %446
    %v450 = vsel %vm172, %v445, 0
    %452 = vmatprep.subr.bf16.mxu0 0
    %453 = vmatpush1.bf16.msra.mxu0 0
    %454 = vmatprep.subr.bf16.mxu0 0
    %455 = vmatpush1.bf16.msra.mxu0 0
    %456 = vmatprep.subr.bf16.mxu0 0
    %457 = vmatpush1.bf16.msra.mxu0 0
    %458 = vmatprep.subr.bf16.mxu0 0
    %459 = vmatpush1.bf16.msra.mxu0 0
    %460 = vmatprep.subr.bf16.mxu0 0
    %461 = vmatpush1.bf16.msra.mxu0 0
    %462 = vmatprep.subr.bf16.mxu0 0
    %463 = vmatpush1.bf16.msra.mxu0 0
    %464 = vmatprep.subr.bf16.mxu0 0
    %465 = vmatpush1.bf16.msra.mxu0 0
    %466 = vmatprep.subr.bf16.mxu0 0
    %467 = vmatpush1.bf16.msra.mxu0 %v447
    %468 = vmatprep.subr.bf16.mxu0 0
    %469 = vmatpush2.bf16.msra.mxu0 0
    %470 = vmatprep.subr.bf16.mxu0 0
    %471 = vmatpush2.bf16.msra.mxu0 0
    %472 = vmatprep.subr.bf16.mxu0 0
    %473 = vmatpush2.bf16.msra.mxu0 0
    %474 = vmatprep.subr.bf16.mxu0 0
    %475 = vmatpush2.bf16.msra.mxu0 0
    %476 = vmatprep.subr.bf16.mxu0 0
    %477 = vmatpush2.bf16.msra.mxu0 0
    %478 = vmatprep.subr.bf16.mxu0 0
    %479 = vmatpush2.bf16.msra.mxu0 0
    %480 = vmatprep.subr.bf16.mxu0 0
    %481 = vmatpush2.bf16.msra.mxu0 0
    %482 = vmatprep.subr.bf16.mxu0 0
    %483 = vmatpush2.bf16.msra.mxu0 0
    %484 = vmatprep.mubr.bf16.mxu0 0
    %485 = vmatmul.mubr.bf16.gmra.mxu0 %v450
    %v486 = vpop.f32.mrf.mxu0
    %v487 = vadd.f32 0.0, %v486
    %v488 = vpop.f32.mrf.mxu0
    %v489 = vpop.f32.mrf.mxu0
    %v490 = vadd.f32 0.0, %v489
    %v491 = vpop.f32.mrf.mxu0
    %492 = vdwg.mxu0
    %493 = vrot.lane.b32.xlu0 %v116, 104
    %v494 = vpop.permute.xlu0 %493
    %495 = vrot.lane.b32.xlu0 %v116, 72
    %v496 = vpop.permute.xlu0 %495
    %v498 = vsel %vm120, %v494, 0
    %v501 = vsel %vm120, %v496, 0
    %503 = vmatprep.subr.bf16.mxu0 0
    %504 = vmatpush1.bf16.xpose.msra.mxu0 0
    %505 = vmatprep.subr.bf16.mxu0 0
    %506 = vmatpush1.bf16.xpose.msra.mxu0 0
    %507 = vmatprep.subr.bf16.mxu0 0
    %508 = vmatpush1.bf16.xpose.msra.mxu0 0
    %509 = vmatprep.subr.bf16.mxu0 0
    %510 = vmatpush1.bf16.xpose.msra.mxu0 0
    %511 = vmatprep.subr.bf16.mxu0 0
    %512 = vmatpush1.bf16.xpose.msra.mxu0 0
    %513 = vmatprep.subr.bf16.mxu0 0
    %514 = vmatpush1.bf16.xpose.msra.mxu0 0
    %515 = vmatprep.subr.bf16.mxu0 0
    %516 = vmatpush1.bf16.xpose.msra.mxu0 0
    %517 = vmatprep.subr.bf16.mxu0 0
    %518 = vmatpush1.bf16.xpose.msra.mxu0 %v501
    %519 = vmatprep.subr.bf16.mxu0 0
    %520 = vmatpush2.bf16.xpose.msra.mxu0 0
    %521 = vmatprep.subr.bf16.mxu0 0
    %522 = vmatpush2.bf16.xpose.msra.mxu0 0
    %523 = vmatprep.subr.bf16.mxu0 0
    %524 = vmatpush2.bf16.xpose.msra.mxu0 0
    %525 = vmatprep.subr.bf16.mxu0 0
    %526 = vmatpush2.bf16.xpose.msra.mxu0 0
    %527 = vmatprep.subr.bf16.mxu0 0
    %528 = vmatpush2.bf16.xpose.msra.mxu0 0
    %529 = vmatprep.subr.bf16.mxu0 0
    %530 = vmatpush2.bf16.xpose.msra.mxu0 0
    %531 = vmatprep.subr.bf16.mxu0 0
    %532 = vmatpush2.bf16.xpose.msra.mxu0 0
    %533 = vmatprep.subr.bf16.mxu0 0
    %534 = vmatpush2.bf16.xpose.msra.mxu0 0
    %535 = vmatprep.mubr.bf16.mxu0 0
    %536 = vmatmul.mubr.bf16.gmra.mxu0 %v498
    %v537 = vpop.f32.mrf.mxu0
    %v538 = vadd.f32 0.0, %v537
    %v539 = vpop.f32.mrf.mxu0
    %v540 = vpop.f32.mrf.mxu0
    %v541 = vadd.f32 0.0, %v540
    %v542 = vpop.f32.mrf.mxu0
    %543 = vdwg.mxu0
    %v544 = vmul.f32 %v538, 0.35355338
    %v545 = vmul.f32 %v541, 0.35355338
    %v546 = vadd.f32 %v544, %v47
    %v547 = vadd.f32 %v545, %v48
    %v548 = vsel %vm172, %v546, -inf
    %549 = vmax.xlane.f32.xlu0 %v548
    %v550 = vpop.xlane.xlu0 %549
    %v551 = vsel %vm172, %v547, -inf
    %552 = vmax.xlane.f32.xlu0 %v551
    %v553 = vpop.xlane.xlu0 %552
    %v554 = vsub.f32 %v546, %v550
    %v555 = vsub.f32 %v547, %v553
    %v556 = vmul.f32 %v554, 1.442695
    %v557 = vpow.pop %v556
    %v558 = vmul.f32 %v555, 1.442695
    %v559 = vpow.pop %v558
    %v560 = vsel %vm172, %v557, 0.0
    %561 = vadd.xlane.f32.xlu0 %v560
    %v562 = vpop.xlane.xlu0 %561
    %v563 = vsel %vm172, %v559, 0.0
    %564 = vadd.xlane.f32.xlu0 %v563
    %v565 = vpop.xlane.xlu0 %564
    %v566 = vrcp.pop %v562
    %v567 = vrcp.pop %v565
    %v568 = vmul.f32 %v557, %v566
    %v569 = vmul.f32 %v559, %v567
    %v570 = vpack.c.bf16 %v569, %v568
    %571 = vrot.lane.b32.xlu0 %v116, 40
    %v572 = vpop.permute.xlu0 %571
    %v575 = vsel %vm172, %v570, 0
    %577 = vmatprep.subr.bf16.mxu0 0
    %578 = vmatpush1.bf16.msra.mxu0 0
    %579 = vmatprep.subr.bf16.mxu0 0
    %580 = vmatpush1.bf16.msra.mxu0 0
    %581 = vmatprep.subr.bf16.mxu0 0
    %582 = vmatpush1.bf16.msra.mxu0 0
    %583 = vmatprep.subr.bf16.mxu0 0
    %584 = vmatpush1.bf16.msra.mxu0 0
    %585 = vmatprep.subr.bf16.mxu0 0
    %586 = vmatpush1.bf16.msra.mxu0 0
    %587 = vmatprep.subr.bf16.mxu0 0
    %588 = vmatpush1.bf16.msra.mxu0 0
    %589 = vmatprep.subr.bf16.mxu0 0
    %590 = vmatpush1.bf16.msra.mxu0 0
    %591 = vmatprep.subr.bf16.mxu0 0
    %592 = vmatpush1.bf16.msra.mxu0 %v572
    %593 = vmatprep.subr.bf16.mxu0 0
    %594 = vmatpush2.bf16.msra.mxu0 0
    %595 = vmatprep.subr.bf16.mxu0 0
    %596 = vmatpush2.bf16.msra.mxu0 0
    %597 = vmatprep.subr.bf16.mxu0 0
    %598 = vmatpush2.bf16.msra.mxu0 0
    %599 = vmatprep.subr.bf16.mxu0 0
    %600 = vmatpush2.bf16.msra.mxu0 0
    %601 = vmatprep.subr.bf16.mxu0 0
    %602 = vmatpush2.bf16.msra.mxu0 0
    %603 = vmatprep.subr.bf16.mxu0 0
    %604 = vmatpush2.bf16.msra.mxu0 0
    %605 = vmatprep.subr.bf16.mxu0 0
    %606 = vmatpush2.bf16.msra.mxu0 0
    %607 = vmatprep.subr.bf16.mxu0 0
    %608 = vmatpush2.bf16.msra.mxu0 0
    %609 = vmatprep.mubr.bf16.mxu0 0
    %610 = vmatmul.mubr.bf16.gmra.mxu0 %v575
    %v611 = vpop.f32.mrf.mxu0
    %v612 = vadd.f32 0.0, %v611
    %v613 = vpop.f32.mrf.mxu0
    %v614 = vpop.f32.mrf.mxu0
    %v615 = vadd.f32 0.0, %v614
    %v616 = vpop.f32.mrf.mxu0
    %617 = vdwg.mxu0
    %620 = vrot.lane.b32.xlu0 %v362, 8
    %v621 = vpop.permute.xlu0 %620
    %622 = vrot.lane.b32.xlu0 %v365, 8
    %v623 = vpop.permute.xlu0 %622
    %628 = vrot.lane.b32.xlu0 %v487, 16
    %v629 = vpop.permute.xlu0 %628
    %630 = vrot.lane.b32.xlu0 %v490, 16
    %v631 = vpop.permute.xlu0 %630
    %636 = vrot.lane.b32.xlu0 %v612, 24
    %v637 = vpop.permute.xlu0 %636
    %638 = vrot.lane.b32.xlu0 %v615, 24
    %v639 = vpop.permute.xlu0 %638
    %v642 = vsel %vm120, %v237, %v621
    %v643 = vsel %vm120, %v240, %v623
    %v644 = vsel %vm172, %v642, %v629
    %v645 = vsel %vm172, %v643, %v631
    %vm646 = vcmask 195584
    %v647 = vsel %vm646, %v644, %v637
    %v648 = vsel %vm646, %v645, %v639
    %v649 = vld [vmem:[#allocation2 + $0x10] sm:$0xf]
    %v650 = vld [vmem:[#allocation2 + $0x14] sm:$0xf]
    %v651 = vld [vmem:[#allocation2 + $0x18] sm:$0xf]
    %v652 = vld [vmem:[#allocation2 + $0x1c] sm:$0xf]
    %v653 = vpack.c.bf16 %v648, %v647
    %v654 = vlaneseq
    %v655 = vshrl.u32 %v654, 7
    %v656 = vsub.s32 1, %v655
    %v657 = vrot.slane %v49, %v656
    %v662 = vunpack.c.l.b16 %v649
    %v663 = vunpack.c.l.b16 %v650
    %v664 = vunpack.c.l.b16 %v651
    %v665 = vunpack.c.l.b16 %v652
    %v666 = vpack.c.b16 %v663, %v662
    %v667 = vpack.c.b16 %v665, %v664
    %v671 = vsel %vm71, %v653, 0
    %673 = vmatprep.subr.bf16.mxu0 0
    %674 = vmatpush1.bf16.msra.mxu0 0
    %675 = vmatprep.subr.bf16.mxu0 0
    %676 = vmatpush1.bf16.msra.mxu0 0
    %677 = vmatprep.subr.bf16.mxu0 0
    %678 = vmatpush1.bf16.msra.mxu0 0
    %679 = vmatprep.subr.bf16.mxu0 0
    %680 = vmatpush1.bf16.msra.mxu0 0
    %681 = vmatprep.subr.bf16.mxu0 0
    %682 = vmatpush1.bf16.msra.mxu0 0
    %683 = vmatprep.subr.bf16.mxu0 0
    %684 = vmatpush1.bf16.msra.mxu0 0
    %685 = vmatprep.subr.bf16.mxu0 0
    %686 = vmatpush1.bf16.msra.mxu0 %v667
    %687 = vmatprep.subr.bf16.mxu0 0
    %688 = vmatpush1.bf16.msra.mxu0 %v666
    %689 = vmatprep.subr.bf16.mxu0 0
    %690 = vmatpush2.bf16.msra.mxu0 0
    %691 = vmatprep.subr.bf16.mxu0 0
    %692 = vmatpush2.bf16.msra.mxu0 0
    %693 = vmatprep.subr.bf16.mxu0 0
    %694 = vmatpush2.bf16.msra.mxu0 0
    %695 = vmatprep.subr.bf16.mxu0 0
    %696 = vmatpush2.bf16.msra.mxu0 0
    %697 = vmatprep.subr.bf16.mxu0 0
    %698 = vmatpush2.bf16.msra.mxu0 0
    %699 = vmatprep.subr.bf16.mxu0 0
    %700 = vmatpush2.bf16.msra.mxu0 0
    %701 = vmatprep.subr.bf16.mxu0 0
    %702 = vmatpush2.bf16.msra.mxu0 0
    %703 = vmatprep.subr.bf16.mxu0 0
    %704 = vmatpush2.bf16.msra.mxu0 0
    %705 = vmatprep.mubr.bf16.mxu0 0
    %706 = vmatmul.mubr.bf16.gmra.mxu0 %v671
    %v707 = vpop.f32.mrf.mxu0
    %v708 = vadd.f32 %v657, %v707
    %v709 = vpop.f32.mrf.mxu0
    %v710 = vpop.f32.mrf.mxu0
    %v711 = vadd.f32 %v657, %v710
    %v712 = vpop.f32.mrf.mxu0
    %713 = vdwg.mxu0
    %v714 = vadd.f32 %v45, %v708
    %v715 = vadd.f32 %v46, %v711
    %v716 = vsel %vm71, %v714, 0.0
    %717 = vadd.xlane.f32.xlu0 %v716
    %v718 = vpop.xlane.xlu0 %717
    %v719 = vsel %vm71, %v715, 0.0
    %720 = vadd.xlane.f32.xlu0 %v719
    %v721 = vpop.xlane.xlu0 %720
    %v722 = vrcp.pop 32.0
    %v723 = vmul.f32 %v718, %v722
    %v724 = vmul.f32 %v721, %v722
    %v725 = vsub.f32 %v714, %v723
    %v726 = vsub.f32 %v715, %v724
    %v727 = vmul.f32 %v725, %v725
    %v728 = vmul.f32 %v726, %v726
    %v729 = vsel %vm71, %v727, 0.0
    %730 = vadd.xlane.f32.xlu0 %v729
    %v731 = vpop.xlane.xlu0 %730
    %v732 = vsel %vm71, %v728, 0.0
    %733 = vadd.xlane.f32.xlu0 %v732
    %v734 = vpop.xlane.xlu0 %733
    %v735 = vmul.f32 %v731, %v722
    %v736 = vmul.f32 %v734, %v722
    %v737 = vadd.f32 %v735, 1e-05
    %v738 = vadd.f32 %v736, 1e-05
    %v739 = vrsqrt.pop %v737
    %v740 = vrsqrt.pop %v738
    %v741 = vmul.f32 %v725, %v739
    %v742 = vmul.f32 %v726, %v740
    %v743 = vlaneseq
    %v744 = vshrl.u32 %v743, 7
    %v745 = vsub.s32 4, %v744
    %v746 = vrot.slane %v49, %v745
    %v747 = vmul.f32 %v741, %v746
    %v748 = vmul.f32 %v742, %v746
    %v749 = vlaneseq
    %v750 = vshrl.u32 %v749, 7
    %v751 = vsub.s32 5, %v750
    %v752 = vrot.slane %v49, %v751
    %v753 = vadd.f32 %v747, %v752
    %v754 = vadd.f32 %v748, %v752
    %v755 = vld [vmem:[#allocation2 + $0x20] sm:$0xf]
    %v756 = vld [vmem:[#allocation2 + $0x24] sm:$0xf]
    %v757 = vld [vmem:[#allocation2 + $0x28] sm:$0xf]
    %v758 = vld [vmem:[#allocation2 + $0x2c] sm:$0xf]
    %v759 = vpack.c.bf16 %v754, %v753
    %v760 = vlaneseq
    %v761 = vshrl.u32 %v760, 7
    %v762 = vsub.s32 2, %v761
    %v763 = vrot.slane %v49, %v762
    %v768 = vunpack.c.l.b16 %v755
    %v769 = vunpack.c.l.b16 %v756
    %v770 = vunpack.c.l.b16 %v757
    %v771 = vunpack.c.l.b16 %v758
    %v772 = vpack.c.b16 %v769, %v768
    %v773 = vpack.c.b16 %v771, %v770
    %v777 = vsel %vm71, %v759, 0
    %779 = vmatprep.subr.bf16.mxu0 0
    %780 = vmatpush1.bf16.msra.mxu0 0
    %781 = vmatprep.subr.bf16.mxu0 0
    %782 = vmatpush1.bf16.msra.mxu0 0
    %783 = vmatprep.subr.bf16.mxu0 0
    %784 = vmatpush1.bf16.msra.mxu0 0
    %785 = vmatprep.subr.bf16.mxu0 0
    %786 = vmatpush1.bf16.msra.mxu0 0
    %787 = vmatprep.subr.bf16.mxu0 0
    %788 = vmatpush1.bf16.msra.mxu0 0
    %789 = vmatprep.subr.bf16.mxu0 0
    %790 = vmatpush1.bf16.msra.mxu0 0
    %791 = vmatprep.subr.bf16.mxu0 0
    %792 = vmatpush1.bf16.msra.mxu0 %v773
    %793 = vmatprep.subr.bf16.mxu0 0
    %794 = vmatpush1.bf16.msra.mxu0 %v772
    %795 = vmatprep.subr.bf16.mxu0 0
    %796 = vmatpush2.bf16.msra.mxu0 0
    %797 = vmatprep.subr.bf16.mxu0 0
    %798 = vmatpush2.bf16.msra.mxu0 0
    %799 = vmatprep.subr.bf16.mxu0 0
    %800 = vmatpush2.bf16.msra.mxu0 0
    %801 = vmatprep.subr.bf16.mxu0 0
    %802 = vmatpush2.bf16.msra.mxu0 0
    %803 = vmatprep.subr.bf16.mxu0 0
    %804 = vmatpush2.bf16.msra.mxu0 0
    %805 = vmatprep.subr.bf16.mxu0 0
    %806 = vmatpush2.bf16.msra.mxu0 0
    %807 = vmatprep.subr.bf16.mxu0 0
    %808 = vmatpush2.bf16.msra.mxu0 0
    %809 = vmatprep.subr.bf16.mxu0 0
    %810 = vmatpush2.bf16.msra.mxu0 0
    %811 = vmatprep.mubr.bf16.mxu0 0
    %812 = vmatmul.mubr.bf16.gmra.mxu0 %v777
    %v813 = vpop.f32.mrf.mxu0
    %v814 = vadd.f32 %v763, %v813
    %v815 = vpop.f32.mrf.mxu0
    %v816 = vpop.f32.mrf.mxu0
    %v817 = vadd.f32 %v763, %v816
    %v818 = vpop.f32.mrf.mxu0
    %819 = vdwg.mxu0
    %v820 = vmax.f32 %v814, 0.0
    %v821 = vmax.f32 %v817, 0.0
    %v822 = vld [vmem:[#allocation2 + $0x30] sm:$0xf]
    %v823 = vld [vmem:[#allocation2 + $0x34] sm:$0xf]
    %v824 = vld [vmem:[#allocation2 + $0x38] sm:$0xf]
    %v825 = vld [vmem:[#allocation2 + $0x3c] sm:$0xf]
    %v826 = vld [vmem:[#allocation2 + $0x40] sm:$0xf]
    %v827 = vld [vmem:[#allocation2 + $0x44] sm:$0xf]
    %v828 = vld [vmem:[#allocation2 + $0x48] sm:$0xf]
    %v829 = vld [vmem:[#allocation2 + $0x4c] sm:$0xf]
    %v830 = vld [vmem:[#allocation2 + $0x50] sm:$0xf]
    %v831 = vld [vmem:[#allocation2 + $0x54] sm:$0xf]
    %v832 = vld [vmem:[#allocation2 + $0x58] sm:$0xf]
    %v833 = vld [vmem:[#allocation2 + $0x5c] sm:$0xf]
    %v834 = vld [vmem:[#allocation2 + $0x60] sm:$0xf]
    %v835 = vld [vmem:[#allocation2 + $0x64] sm:$0xf]
    %v836 = vld [vmem:[#allocation2 + $0x68] sm:$0xf]
    %v837 = vld [vmem:[#allocation2 + $0x6c] sm:$0xf]
    %v838 = vpack.c.bf16 %v821, %v820
    %v839 = vlaneseq
    %v840 = vshrl.u32 %v839, 7
    %v841 = vsub.s32 3, %v840
    %v842 = vrot.slane %v49, %v841
    %v859 = vunpack.c.l.b16 %v822
    %v860 = vunpack.c.l.b16 %v823
    %v861 = vunpack.c.l.b16 %v824
    %v862 = vunpack.c.l.b16 %v825
    %v863 = vunpack.c.l.b16 %v826
    %v864 = vunpack.c.l.b16 %v827
    %v865 = vunpack.c.l.b16 %v828
    %v866 = vunpack.c.l.b16 %v829
    %v867 = vunpack.c.l.b16 %v830
    %v868 = vunpack.c.l.b16 %v831
    %v869 = vunpack.c.l.b16 %v832
    %v870 = vunpack.c.l.b16 %v833
    %v871 = vunpack.c.l.b16 %v834
    %v872 = vunpack.c.l.b16 %v835
    %v873 = vunpack.c.l.b16 %v836
    %v874 = vunpack.c.l.b16 %v837
    %v875 = vpack.c.b16 %v860, %v859
    %v876 = vpack.c.b16 %v862, %v861
    %v877 = vpack.c.b16 %v864, %v863
    %v878 = vpack.c.b16 %v866, %v865
    %v879 = vpack.c.b16 %v868, %v867
    %v880 = vpack.c.b16 %v870, %v869
    %v881 = vpack.c.b16 %v872, %v871
    %v882 = vpack.c.b16 %v874, %v873
    %891 = vmatprep.subr.bf16.mxu0 0
    %892 = vmatpush1.bf16.msra.mxu0 %v882
    %893 = vmatprep.subr.bf16.mxu0 0
    %894 = vmatpush1.bf16.msra.mxu0 %v881
    %895 = vmatprep.subr.bf16.mxu0 0
    %896 = vmatpush1.bf16.msra.mxu0 %v880
    %897 = vmatprep.subr.bf16.mxu0 0
    %898 = vmatpush1.bf16.msra.mxu0 %v879
    %899 = vmatprep.subr.bf16.mxu0 0
    %900 = vmatpush1.bf16.msra.mxu0 %v878
    %901 = vmatprep.subr.bf16.mxu0 0
    %902 = vmatpush1.bf16.msra.mxu0 %v877
    %903 = vmatprep.subr.bf16.mxu0 0
    %904 = vmatpush1.bf16.msra.mxu0 %v876
    %905 = vmatprep.subr.bf16.mxu0 0
    %906 = vmatpush1.bf16.msra.mxu0 %v875
    %907 = vmatprep.subr.bf16.mxu0 0
    %908 = vmatpush2.bf16.msra.mxu0 0
    %909 = vmatprep.subr.bf16.mxu0 0
    %910 = vmatpush2.bf16.msra.mxu0 0
    %911 = vmatprep.subr.bf16.mxu0 0
    %912 = vmatpush2.bf16.msra.mxu0 0
    %913 = vmatprep.subr.bf16.mxu0 0
    %914 = vmatpush2.bf16.msra.mxu0 0
    %915 = vmatprep.subr.bf16.mxu0 0
    %916 = vmatpush2.bf16.msra.mxu0 0
    %917 = vmatprep.subr.bf16.mxu0 0
    %918 = vmatpush2.bf16.msra.mxu0 0
    %919 = vmatprep.subr.bf16.mxu0 0
    %920 = vmatpush2.bf16.msra.mxu0 0
    %921 = vmatprep.subr.bf16.mxu0 0
    %922 = vmatpush2.bf16.msra.mxu0 0
    %923 = vmatprep.mubr.bf16.mxu0 0
    %924 = vmatmul.mubr.bf16.gmra.mxu0 %v838
    %v925 = vpop.f32.mrf.mxu0
    %v926 = vadd.f32 %v842, %v925
    %v927 = vpop.f32.mrf.mxu0
    %v928 = vpop.f32.mrf.mxu0
    %v929 = vadd.f32 %v842, %v928
    %v930 = vpop.f32.mrf.mxu0
    %931 = vdwg.mxu0
    %v932 = vadd.f32 %v753, %v926
    %v933 = vadd.f32 %v754, %v929
    %v934 = vsel %vm71, %v932, 0.0
    %935 = vadd.xlane.f32.xlu0 %v934
    %v936 = vpop.xlane.xlu0 %935
    %v937 = vsel %vm71, %v933, 0.0
    %938 = vadd.xlane.f32.xlu0 %v937
    %v939 = vpop.xlane.xlu0 %938
    %v940 = vmul.f32 %v936, %v722
    %v941 = vmul.f32 %v939, %v722
    %v942 = vsub.f32 %v932, %v940
    %v943 = vsub.f32 %v933, %v941
    %v944 = vmul.f32 %v942, %v942
    %v945 = vmul.f32 %v943, %v943
    %v946 = vsel %vm71, %v944, 0.0
    %947 = vadd.xlane.f32.xlu0 %v946
    %v948 = vpop.xlane.xlu0 %947
    %v949 = vsel %vm71, %v945, 0.0
    %950 = vadd.xlane.f32.xlu0 %v949
    %v951 = vpop.xlane.xlu0 %950
    %v952 = vmul.f32 %v948, %v722
    %v953 = vmul.f32 %v951, %v722
    %v954 = vadd.f32 %v952, 1e-05
    %v955 = vadd.f32 %v953, 1e-05
    %v956 = vrsqrt.pop %v954
    %v957 = vrsqrt.pop %v955
    %v958 = vmul.f32 %v942, %v956
    %v959 = vmul.f32 %v943, %v957
    %v960 = vlaneseq
    %v961 = vshrl.u32 %v960, 7
    %v962 = vsub.s32 6, %v961
    %v963 = vrot.slane %v49, %v962
    %v964 = vmul.f32 %v958, %v963
    %v965 = vmul.f32 %v959, %v963
    %v966 = vlaneseq
    %v967 = vshrl.u32 %v966, 7
    %v968 = vsub.s32 7, %v967
    %v969 = vrot.slane %v49, %v968
    %v970 = vadd.f32 %v964, %v969
    %v971 = vadd.f32 %v965, %v969
    %s972 = scalar_lea.vmem %s4, 8
    %v973 = vld [vmem:[%s972] sm:$0xff]
    %s974 = scalar_lea.vmem [#allocation2], 112
    %v975 = vld [vmem:[%s974] sm:$0xf]
    %v976 = vld [vmem:[%s974 + $0x4] sm:$0xf]
    %v977 = vld [vmem:[%s974 + $0x8] sm:$0xf]
    %v978 = vld [vmem:[%s974 + $0xc] sm:$0xf]
    %v979 = vpack.c.bf16 %v971, %v970
    %v980 = vlaneseq
    %v981 = vshrl.u32 %v980, 7
    %v982 = vsub.s32 0, %v981
    %v983 = vrot.slane %v973, %v982
    %v988 = vunpack.c.l.b16 %v975
    %v989 = vunpack.c.l.b16 %v976
    %v990 = vunpack.c.l.b16 %v977
    %v991 = vunpack.c.l.b16 %v978
    %v992 = vpack.c.b16 %v989, %v988
    %v993 = vpack.c.b16 %v991, %v990
    %v997 = vsel %vm71, %v979, 0
    %999 = vmatprep.subr.bf16.mxu0 0
    %1000 = vmatpush1.bf16.msra.mxu0 0
    %1001 = vmatprep.subr.bf16.mxu0 0
    %1002 = vmatpush1.bf16.msra.mxu0 0
    %1003 = vmatprep.subr.bf16.mxu0 0
    %1004 = vmatpush1.bf16.msra.mxu0 0
    %1005 = vmatprep.subr.bf16.mxu0 0
    %1006 = vmatpush1.bf16.msra.mxu0 0
    %1007 = vmatprep.subr.bf16.mxu0 0
    %1008 = vmatpush1.bf16.msra.mxu0 0
    %1009 = vmatprep.subr.bf16.mxu0 0
    %1010 = vmatpush1.bf16.msra.mxu0 0
    %1011 = vmatprep.subr.bf16.mxu0 0
    %1012 = vmatpush1.bf16.msra.mxu0 %v993
    %1013 = vmatprep.subr.bf16.mxu0 0
    %1014 = vmatpush1.bf16.msra.mxu0 %v992
    %1015 = vmatprep.subr.bf16.mxu0 0
    %1016 = vmatpush2.bf16.msra.mxu0 0
    %1017 = vmatprep.subr.bf16.mxu0 0
    %1018 = vmatpush2.bf16.msra.mxu0 0
    %1019 = vmatprep.subr.bf16.mxu0 0
    %1020 = vmatpush2.bf16.msra.mxu0 0
    %1021 = vmatprep.subr.bf16.mxu0 0
    %1022 = vmatpush2.bf16.msra.mxu0 0
    %1023 = vmatprep.subr.bf16.mxu0 0
    %1024 = vmatpush2.bf16.msra.mxu0 0
    %1025 = vmatprep.subr.bf16.mxu0 0
    %1026 = vmatpush2.bf16.msra.mxu0 0
    %1027 = vmatprep.subr.bf16.mxu0 0
    %1028 = vmatpush2.bf16.msra.mxu0 0
    %1029 = vmatprep.subr.bf16.mxu0 0
    %1030 = vmatpush2.bf16.msra.mxu0 0
    %1031 = vmatprep.mubr.bf16.mxu0 0
    %1032 = vmatmul.mubr.bf16.gmra.mxu0 %v997
    %v1033 = vpop.f32.mrf.mxu0
    %v1034 = vadd.f32 %v983, %v1033
    %v1035 = vpop.f32.mrf.mxu0
    %v1036 = vpop.f32.mrf.mxu0
    %v1037 = vadd.f32 %v983, %v1036
    %v1038 = vpop.f32.mrf.mxu0
    %1039 = vdwg.mxu0
    %v1040 = vpack.c.bf16 %v1037, %v1034
    %1042 = vrot.lane.b32.xlu0 %v1040, 96
    %v1043 = vpop.permute.xlu0 %1042
    %v1045 = vsel %vm120, %v1040, 0
    %v1048 = vsel %vm120, %v1043, 0
    %1050 = vmatprep.subr.bf16.mxu0 0
    %1051 = vmatpush1.bf16.xpose.msra.mxu0 0
    %1052 = vmatprep.subr.bf16.mxu0 0
    %1053 = vmatpush1.bf16.xpose.msra.mxu0 0
    %1054 = vmatprep.subr.bf16.mxu0 0
    %1055 = vmatpush1.bf16.xpose.msra.mxu0 0
    %1056 = vmatprep.subr.bf16.mxu0 0
    %1057 = vmatpush1.bf16.xpose.msra.mxu0 0
    %1058 = vmatprep.subr.bf16.mxu0 0
    %1059 = vmatpush1.bf16.xpose.msra.mxu0 0
    %1060 = vmatprep.subr.bf16.mxu0 0
    %1061 = vmatpush1.bf16.xpose.msra.mxu0 0
    %1062 = vmatprep.subr.bf16.mxu0 0
    %1063 = vmatpush1.bf16.xpose.msra.mxu0 0
    %1064 = vmatprep.subr.bf16.mxu0 0
    %1065 = vmatpush1.bf16.xpose.msra.mxu0 %v1048
    %1066 = vmatprep.subr.bf16.mxu0 0
    %1067 = vmatpush2.bf16.xpose.msra.mxu0 0
    %1068 = vmatprep.subr.bf16.mxu0 0
    %1069 = vmatpush2.bf16.xpose.msra.mxu0 0
    %1070 = vmatprep.subr.bf16.mxu0 0
    %1071 = vmatpush2.bf16.xpose.msra.mxu0 0
    %1072 = vmatprep.subr.bf16.mxu0 0
    %1073 = vmatpush2.bf16.xpose.msra.mxu0 0
    %1074 = vmatprep.subr.bf16.mxu0 0
    %1075 = vmatpush2.bf16.xpose.msra.mxu0 0
    %1076 = vmatprep.subr.bf16.mxu0 0
    %1077 = vmatpush2.bf16.xpose.msra.mxu0 0
    %1078 = vmatprep.subr.bf16.mxu0 0
    %1079 = vmatpush2.bf16.xpose.msra.mxu0 0
    %1080 = vmatprep.subr.bf16.mxu0 0
    %1081 = vmatpush2.bf16.xpose.msra.mxu0 0
    %1082 = vmatprep.mubr.bf16.mxu0 0
    %1083 = vmatmul.mubr.bf16.gmra.mxu0 %v1045
    %v1084 = vpop.f32.mrf.mxu0
    %v1085 = vadd.f32 0.0, %v1084
    %v1086 = vpop.f32.mrf.mxu0
    %v1087 = vpop.f32.mrf.mxu0
    %v1088 = vadd.f32 0.0, %v1087
    %v1089 = vpop.f32.mrf.mxu0
    %1090 = vdwg.mxu0
    %v1091 = vmul.f32 %v1085, 0.35355338
    %v1092 = vmul.f32 %v1088, 0.35355338
    %v1093 = vadd.f32 %v1091, %v47
    %v1094 = vadd.f32 %v1092, %v48
    %v1095 = vsel %vm172, %v1093, -inf
    %1096 = vmax.xlane.f32.xlu0 %v1095
    %v1097 = vpop.xlane.xlu0 %1096
    %v1098 = vsel %vm172, %v1094, -inf
    %1099 = vmax.xlane.f32.xlu0 %v1098
    %v1100 = vpop.xlane.xlu0 %1099
    %v1101 = vsub.f32 %v1093, %v1097
    %v1102 = vsub.f32 %v1094, %v1100
    %v1103 = vmul.f32 %v1101, 1.442695
    %v1104 = vpow.pop %v1103
    %v1105 = vmul.f32 %v1102, 1.442695
    %v1106 = vpow.pop %v1105
    %v1107 = vsel %vm172, %v1104, 0.0
    %1108 = vadd.xlane.f32.xlu0 %v1107
    %v1109 = vpop.xlane.xlu0 %1108
    %v1110 = vsel %vm172, %v1106, 0.0
    %1111 = vadd.xlane.f32.xlu0 %v1110
    %v1112 = vpop.xlane.xlu0 %1111
    %v1113 = vrcp.pop %v1109
    %v1114 = vrcp.pop %v1112
    %v1115 = vmul.f32 %v1104, %v1113
    %v1116 = vmul.f32 %v1106, %v1114
    %v1117 = vpack.c.bf16 %v1116, %v1115
    %1118 = vrot.lane.b32.xlu0 %v1040, 64
    %v1119 = vpop.permute.xlu0 %1118
    %v1122 = vsel %vm172, %v1117, 0
    %1124 = vmatprep.subr.bf16.mxu0 0
    %1125 = vmatpush1.bf16.msra.mxu0 0
    %1126 = vmatprep.subr.bf16.mxu0 0
    %1127 = vmatpush1.bf16.msra.mxu0 0
    %1128 = vmatprep.subr.bf16.mxu0 0
    %1129 = vmatpush1.bf16.msra.mxu0 0
    %1130 = vmatprep.subr.bf16.mxu0 0
    %1131 = vmatpush1.bf16.msra.mxu0 0
    %1132 = vmatprep.subr.bf16.mxu0 0
    %1133 = vmatpush1.bf16.msra.mxu0 0
    %1134 = vmatprep.subr.bf16.mxu0 0
    %1135 = vmatpush1.bf16.msra.mxu0 0
    %1136 = vmatprep.subr.bf16.mxu0 0
    %1137 = vmatpush1.bf16.msra.mxu0 0
    %1138 = vmatprep.subr.bf16.mxu0 0
    %1139 = vmatpush1.bf16.msra.mxu0 %v1119
    %1140 = vmatprep.subr.bf16.mxu0 0
    %1141 = vmatpush2.bf16.msra.mxu0 0
    %1142 = vmatprep.subr.bf16.mxu0 0
    %1143 = vmatpush2.bf16.msra.mxu0 0
    %1144 = vmatprep.subr.bf16.mxu0 0
    %1145 = vmatpush2.bf16.msra.mxu0 0
    %1146 = vmatprep.subr.bf16.mxu0 0
    %1147 = vmatpush2.bf16.msra.mxu0 0
    %1148 = vmatprep.subr.bf16.mxu0 0
    %1149 = vmatpush2.bf16.msra.mxu0 0
    %1150 = vmatprep.subr.bf16.mxu0 0
    %1151 = vmatpush2.bf16.msra.mxu0 0
    %1152 = vmatprep.subr.bf16.mxu0 0
    %1153 = vmatpush2.bf16.msra.mxu0 0
    %1154 = vmatprep.subr.bf16.mxu0 0
    %1155 = vmatpush2.bf16.msra.mxu0 0
    %1156 = vmatprep.mubr.bf16.mxu0 0
    %1157 = vmatmul.mubr.bf16.gmra.mxu0 %v1122
    %v1158 = vpop.f32.mrf.mxu0
    %v1159 = vadd.f32 0.0, %v1158
    %v1160 = vpop.f32.mrf.mxu0
    %v1161 = vpop.f32.mrf.mxu0
    %v1162 = vadd.f32 0.0, %v1161
    %v1163 = vpop.f32.mrf.mxu0
    %1164 = vdwg.mxu0
    %1165 = vrot.lane.b32.xlu0 %v1040, 120
    %v1166 = vpop.permute.xlu0 %1165
    %1167 = vrot.lane.b32.xlu0 %v1040, 88
    %v1168 = vpop.permute.xlu0 %1167
    %v1170 = vsel %vm120, %v1166, 0
    %v1173 = vsel %vm120, %v1168, 0
    %1175 = vmatprep.subr.bf16.mxu0 0
    %1176 = vmatpush1.bf16.xpose.msra.mxu0 0
    %1177 = vmatprep.subr.bf16.mxu0 0
    %1178 = vmatpush1.bf16.xpose.msra.mxu0 0
    %1179 = vmatprep.subr.bf16.mxu0 0
    %1180 = vmatpush1.bf16.xpose.msra.mxu0 0
    %1181 = vmatprep.subr.bf16.mxu0 0
    %1182 = vmatpush1.bf16.xpose.msra.mxu0 0
    %1183 = vmatprep.subr.bf16.mxu0 0
    %1184 = vmatpush1.bf16.xpose.msra.mxu0 0
    %1185 = vmatprep.subr.bf16.mxu0 0
    %1186 = vmatpush1.bf16.xpose.msra.mxu0 0
    %1187 = vmatprep.subr.bf16.mxu0 0
    %1188 = vmatpush1.bf16.xpose.msra.mxu0 0
    %1189 = vmatprep.subr.bf16.mxu0 0
    %1190 = vmatpush1.bf16.xpose.msra.mxu0 %v1173
    %1191 = vmatprep.subr.bf16.mxu0 0
    %1192 = vmatpush2.bf16.xpose.msra.mxu0 0
    %1193 = vmatprep.subr.bf16.mxu0 0
    %1194 = vmatpush2.bf16.xpose.msra.mxu0 0
    %1195 = vmatprep.subr.bf16.mxu0 0
    %1196 = vmatpush2.bf16.xpose.msra.mxu0 0
    %1197 = vmatprep.subr.bf16.mxu0 0
    %1198 = vmatpush2.bf16.xpose.msra.mxu0 0
    %1199 = vmatprep.subr.bf16.mxu0 0
    %1200 = vmatpush2.bf16.xpose.msra.mxu0 0
    %1201 = vmatprep.subr.bf16.mxu0 0
    %1202 = vmatpush2.bf16.xpose.msra.mxu0 0
    %1203 = vmatprep.subr.bf16.mxu0 0
    %1204 = vmatpush2.bf16.xpose.msra.mxu0 0
    %1205 = vmatprep.subr.bf16.mxu0 0
    %1206 = vmatpush2.bf16.xpose.msra.mxu0 0
    %1207 = vmatprep.mubr.bf16.mxu0 0
    %1208 = vmatmul.mubr.bf16.gmra.mxu0 %v1170
    %v1209 = vpop.f32.mrf.mxu0
    %v1210 = vadd.f32 0.0, %v1209
    %v1211 = vpop.f32.mrf.mxu0
    %v1212 = vpop.f32.mrf.mxu0
    %v1213 = vadd.f32 0.0, %v1212
    %v1214 = vpop.f32.mrf.mxu0
    %1215 = vdwg.mxu0
    %v1216 = vmul.f32 %v1210, 0.35355338
    %v1217 = vmul.f32 %v1213, 0.35355338
    %v1218 = vadd.f32 %v1216, %v47
    %v1219 = vadd.f32 %v1217, %v48
    %v1220 = vsel %vm172, %v1218, -inf
    %1221 = vmax.xlane.f32.xlu0 %v1220
    %v1222 = vpop.xlane.xlu0 %1221
    %v1223 = vsel %vm172, %v1219, -inf
    %1224 = vmax.xlane.f32.xlu0 %v1223
    %v1225 = vpop.xlane.xlu0 %1224
    %v1226 = vsub.f32 %v1218, %v1222
    %v1227 = vsub.f32 %v1219, %v1225
    %v1228 = vmul.f32 %v1226, 1.442695
    %v1229 = vpow.pop %v1228
    %v1230 = vmul.f32 %v1227, 1.442695
    %v1231 = vpow.pop %v1230
    %v1232 = vsel %vm172, %v1229, 0.0
    %1233 = vadd.xlane.f32.xlu0 %v1232
    %v1234 = vpop.xlane.xlu0 %1233
    %v1235 = vsel %vm172, %v1231, 0.0
    %1236 = vadd.xlane.f32.xlu0 %v1235
    %v1237 = vpop.xlane.xlu0 %1236
    %v1238 = vrcp.pop %v1234
    %v1239 = vrcp.pop %v1237
    %v1240 = vmul.f32 %v1229, %v1238
    %v1241 = vmul.f32 %v1231, %v1239
    %v1242 = vpack.c.bf16 %v1241, %v1240
    %1243 = vrot.lane.b32.xlu0 %v1040, 56
    %v1244 = vpop.permute.xlu0 %1243
    %v1247 = vsel %vm172, %v1242, 0
    %1249 = vmatprep.subr.bf16.mxu0 0
    %1250 = vmatpush1.bf16.msra.mxu0 0
    %1251 = vmatprep.subr.bf16.mxu0 0
    %1252 = vmatpush1.bf16.msra.mxu0 0
    %1253 = vmatprep.subr.bf16.mxu0 0
    %1254 = vmatpush1.bf16.msra.mxu0 0
    %1255 = vmatprep.subr.bf16.mxu0 0
    %1256 = vmatpush1.bf16.msra.mxu0 0
    %1257 = vmatprep.subr.bf16.mxu0 0
    %1258 = vmatpush1.bf16.msra.mxu0 0
    %1259 = vmatprep.subr.bf16.mxu0 0
    %1260 = vmatpush1.bf16.msra.mxu0 0
    %1261 = vmatprep.subr.bf16.mxu0 0
    %1262 = vmatpush1.bf16.msra.mxu0 0
    %1263 = vmatprep.subr.bf16.mxu0 0
    %1264 = vmatpush1.bf16.msra.mxu0 %v1244
    %1265 = vmatprep.subr.bf16.mxu0 0
    %1266 = vmatpush2.bf16.msra.mxu0 0
    %1267 = vmatprep.subr.bf16.mxu0 0
    %1268 = vmatpush2.bf16.msra.mxu0 0
    %1269 = vmatprep.subr.bf16.mxu0 0
    %1270 = vmatpush2.bf16.msra.mxu0 0
    %1271 = vmatprep.subr.bf16.mxu0 0
    %1272 = vmatpush2.bf16.msra.mxu0 0
    %1273 = vmatprep.subr.bf16.mxu0 0
    %1274 = vmatpush2.bf16.msra.mxu0 0
    %1275 = vmatprep.subr.bf16.mxu0 0
    %1276 = vmatpush2.bf16.msra.mxu0 0
    %1277 = vmatprep.subr.bf16.mxu0 0
    %1278 = vmatpush2.bf16.msra.mxu0 0
    %1279 = vmatprep.subr.bf16.mxu0 0
    %1280 = vmatpush2.bf16.msra.mxu0 0
    %1281 = vmatprep.mubr.bf16.mxu0 0
    %1282 = vmatmul.mubr.bf16.gmra.mxu0 %v1247
    %v1283 = vpop.f32.mrf.mxu0
    %v1284 = vadd.f32 0.0, %v1283
    %v1285 = vpop.f32.mrf.mxu0
    %v1286 = vpop.f32.mrf.mxu0
    %v1287 = vadd.f32 0.0, %v1286
    %v1288 = vpop.f32.mrf.mxu0
    %1289 = vdwg.mxu0
    %1290 = vrot.lane.b32.xlu0 %v1040, 112
    %v1291 = vpop.permute.xlu0 %1290
    %1292 = vrot.lane.b32.xlu0 %v1040, 80
    %v1293 = vpop.permute.xlu0 %1292
    %v1295 = vsel %vm120, %v1291, 0
    %v1298 = vsel %vm120, %v1293, 0
    %1300 = vmatprep.subr.bf16.mxu0 0
    %1301 = vmatpush1.bf16.xpose.msra.mxu0 0
    %1302 = vmatprep.subr.bf16.mxu0 0
    %1303 = vmatpush1.bf16.xpose.msra.mxu0 0
    %1304 = vmatprep.subr.bf16.mxu0 0
    %1305 = vmatpush1.bf16.xpose.msra.mxu0 0
    %1306 = vmatprep.subr.bf16.mxu0 0
    %1307 = vmatpush1.bf16.xpose.msra.mxu0 0
    %1308 = vmatprep.subr.bf16.mxu0 0
    %1309 = vmatpush1.bf16.xpose.msra.mxu0 0
    %1310 = vmatprep.subr.bf16.mxu0 0
    %1311 = vmatpush1.bf16.xpose.msra.mxu0 0
    %1312 = vmatprep.subr.bf16.mxu0 0
    %1313 = vmatpush1.bf16.xpose.msra.mxu0 0
    %1314 = vmatprep.subr.bf16.mxu0 0
    %1315 = vmatpush1.bf16.xpose.msra.mxu0 %v1298
    %1316 = vmatprep.subr.bf16.mxu0 0
    %1317 = vmatpush2.bf16.xpose.msra.mxu0 0
    %1318 = vmatprep.subr.bf16.mxu0 0
    %1319 = vmatpush2.bf16.xpose.msra.mxu0 0
    %1320 = vmatprep.subr.bf16.mxu0 0
    %1321 = vmatpush2.bf16.xpose.msra.mxu0 0
    %1322 = vmatprep.subr.bf16.mxu0 0
    %1323 = vmatpush2.bf16.xpose.msra.mxu0 0
    %1324 = vmatprep.subr.bf16.mxu0 0
    %1325 = vmatpush2.bf16.xpose.msra.mxu0 0
    %1326 = vmatprep.subr.bf16.mxu0 0
    %1327 = vmatpush2.bf16.xpose.msra.mxu0 0
    %1328 = vmatprep.subr.bf16.mxu0 0
    %1329 = vmatpush2.bf16.xpose.msra.mxu0 0
    %1330 = vmatprep.subr.bf16.mxu0 0
    %1331 = vmatpush2.bf16.xpose.msra.mxu0 0
    %1332 = vmatprep.mubr.bf16.mxu0 0
    %1333 = vmatmul.mubr.bf16.gmra.mxu0 %v1295
    %v1334 = vpop.f32.mrf.mxu0
    %v1335 = vadd.f32 0.0, %v1334
    %v1336 = vpop.f32.mrf.mxu0
    %v1337 = vpop.f32.mrf.mxu0
    %v1338 = vadd.f32 0.0, %v1337
    %v1339 = vpop.f32.mrf.mxu0
    %1340 = vdwg.mxu0
    %v1341 = vmul.f32 %v1335, 0.35355338
    %v1342 = vmul.f32 %v1338, 0.35355338
    %v1343 = vadd.f32 %v1341, %v47
    %v1344 = vadd.f32 %v1342, %v48
    %v1345 = vsel %vm172, %v1343, -inf
    %1346 = vmax.xlane.f32.xlu0 %v1345
    %v1347 = vpop.xlane.xlu0 %1346
    %v1348 = vsel %vm172, %v1344, -inf
    %1349 = vmax.xlane.f32.xlu0 %v1348
    %v1350 = vpop.xlane.xlu0 %1349
    %v1351 = vsub.f32 %v1343, %v1347
    %v1352 = vsub.f32 %v1344, %v1350
    %v1353 = vmul.f32 %v1351, 1.442695
    %v1354 = vpow.pop %v1353
    %v1355 = vmul.f32 %v1352, 1.442695
    %v1356 = vpow.pop %v1355
    %v1357 = vsel %vm172, %v1354, 0.0
    %1358 = vadd.xlane.f32.xlu0 %v1357
    %v1359 = vpop.xlane.xlu0 %1358
    %v1360 = vsel %vm172, %v1356, 0.0
    %1361 = vadd.xlane.f32.xlu0 %v1360
    %v1362 = vpop.xlane.xlu0 %1361
    %v1363 = vrcp.pop %v1359
    %v1364 = vrcp.pop %v1362
    %v1365 = vmul.f32 %v1354, %v1363
    %v1366 = vmul.f32 %v1356, %v1364
    %v1367 = vpack.c.bf16 %v1366, %v1365
    %1368 = vrot.lane.b32.xlu0 %v1040, 48
    %v1369 = vpop.permute.xlu0 %1368
    %v1372 = vsel %vm172, %v1367, 0
    %1374 = vmatprep.subr.bf16.mxu0 0
    %1375 = vmatpush1.bf16.msra.mxu0 0
    %1376 = vmatprep.subr.bf16.mxu0 0
    %1377 = vmatpush1.bf16.msra.mxu0 0
    %1378 = vmatprep.subr.bf16.mxu0 0
    %1379 = vmatpush1.bf16.msra.mxu0 0
    %1380 = vmatprep.subr.bf16.mxu0 0
    %1381 = vmatpush1.bf16.msra.mxu0 0
    %1382 = vmatprep.subr.bf16.mxu0 0
    %1383 = vmatpush1.bf16.msra.mxu0 0
    %1384 = vmatprep.subr.bf16.mxu0 0
    %1385 = vmatpush1.bf16.msra.mxu0 0
    %1386 = vmatprep.subr.bf16.mxu0 0
    %1387 = vmatpush1.bf16.msra.mxu0 0
    %1388 = vmatprep.subr.bf16.mxu0 0
    %1389 = vmatpush1.bf16.msra.mxu0 %v1369
    %1390 = vmatprep.subr.bf16.mxu0 0
    %1391 = vmatpush2.bf16.msra.mxu0 0
    %1392 = vmatprep.subr.bf16.mxu0 0
    %1393 = vmatpush2.bf16.msra.mxu0 0
    %1394 = vmatprep.subr.bf16.mxu0 0
    %1395 = vmatpush2.bf16.msra.mxu0 0
    %1396 = vmatprep.subr.bf16.mxu0 0
    %1397 = vmatpush2.bf16.msra.mxu0 0
    %1398 = vmatprep.subr.bf16.mxu0 0
    %1399 = vmatpush2.bf16.msra.mxu0 0
    %1400 = vmatprep.subr.bf16.mxu0 0
    %1401 = vmatpush2.bf16.msra.mxu0 0
    %1402 = vmatprep.subr.bf16.mxu0 0
    %1403 = vmatpush2.bf16.msra.mxu0 0
    %1404 = vmatprep.subr.bf16.mxu0 0
    %1405 = vmatpush2.bf16.msra.mxu0 0
    %1406 = vmatprep.mubr.bf16.mxu0 0
    %1407 = vmatmul.mubr.bf16.gmra.mxu0 %v1372
    %v1408 = vpop.f32.mrf.mxu0
    %v1409 = vadd.f32 0.0, %v1408
    %v1410 = vpop.f32.mrf.mxu0
    %v1411 = vpop.f32.mrf.mxu0
    %v1412 = vadd.f32 0.0, %v1411
    %v1413 = vpop.f32.mrf.mxu0
    %1414 = vdwg.mxu0
    %1415 = vrot.lane.b32.xlu0 %v1040, 104
    %v1416 = vpop.permute.xlu0 %1415
    %1417 = vrot.lane.b32.xlu0 %v1040, 72
    %v1418 = vpop.permute.xlu0 %1417
    %v1420 = vsel %vm120, %v1416, 0
    %v1423 = vsel %vm120, %v1418, 0
    %1425 = vmatprep.subr.bf16.mxu0 0
    %1426 = vmatpush1.bf16.xpose.msra.mxu0 0
    %1427 = vmatprep.subr.bf16.mxu0 0
    %1428 = vmatpush1.bf16.xpose.msra.mxu0 0
    %1429 = vmatprep.subr.bf16.mxu0 0
    %1430 = vmatpush1.bf16.xpose.msra.mxu0 0
    %1431 = vmatprep.subr.bf16.mxu0 0
    %1432 = vmatpush1.bf16.xpose.msra.mxu0 0
    %1433 = vmatprep.subr.bf16.mxu0 0
    %1434 = vmatpush1.bf16.xpose.msra.mxu0 0
    %1435 = vmatprep.subr.bf16.mxu0 0
    %1436 = vmatpush1.bf16.xpose.msra.mxu0 0
    %1437 = vmatprep.subr.bf16.mxu0 0
    %1438 = vmatpush1.bf16.xpose.msra.mxu0 0
    %1439 = vmatprep.subr.bf16.mxu0 0
    %1440 = vmatpush1.bf16.xpose.msra.mxu0 %v1423
    %1441 = vmatprep.subr.bf16.mxu0 0
    %1442 = vmatpush2.bf16.xpose.msra.mxu0 0
    %1443 = vmatprep.subr.bf16.mxu0 0
    %1444 = vmatpush2.bf16.xpose.msra.mxu0 0
    %1445 = vmatprep.subr.bf16.mxu0 0
    %1446 = vmatpush2.bf16.xpose.msra.mxu0 0
    %1447 = vmatprep.subr.bf16.mxu0 0
    %1448 = vmatpush2.bf16.xpose.msra.mxu0 0
    %1449 = vmatprep.subr.bf16.mxu0 0
    %1450 = vmatpush2.bf16.xpose.msra.mxu0 0
    %1451 = vmatprep.subr.bf16.mxu0 0
    %1452 = vmatpush2.bf16.xpose.msra.mxu0 0
    %1453 = vmatprep.subr.bf16.mxu0 0
    %1454 = vmatpush2.bf16.xpose.msra.mxu0 0
    %1455 = vmatprep.subr.bf16.mxu0 0
    %1456 = vmatpush2.bf16.xpose.msra.mxu0 0
    %1457 = vmatprep.mubr.bf16.mxu0 0
    %1458 = vmatmul.mubr.bf16.gmra.mxu0 %v1420
    %v1459 = vpop.f32.mrf.mxu0
    %v1460 = vadd.f32 0.0, %v1459
    %v1461 = vpop.f32.mrf.mxu0
    %v1462 = vpop.f32.mrf.mxu0
    %v1463 = vadd.f32 0.0, %v1462
    %v1464 = vpop.f32.mrf.mxu0
    %1465 = vdwg.mxu0
    %v1466 = vmul.f32 %v1460, 0.35355338
    %v1467 = vmul.f32 %v1463, 0.35355338
    %v1468 = vadd.f32 %v1466, %v47
    %v1469 = vadd.f32 %v1467, %v48
    %v1470 = vsel %vm172, %v1468, -inf
    %1471 = vmax.xlane.f32.xlu0 %v1470
    %v1472 = vpop.xlane.xlu0 %1471
    %v1473 = vsel %vm172, %v1469, -inf
    %1474 = vmax.xlane.f32.xlu0 %v1473
    %v1475 = vpop.xlane.xlu0 %1474
    %v1476 = vsub.f32 %v1468, %v1472
    %v1477 = vsub.f32 %v1469, %v1475
    %v1478 = vmul.f32 %v1476, 1.442695
    %v1479 = vpow.pop %v1478
    %v1480 = vmul.f32 %v1477, 1.442695
    %v1481 = vpow.pop %v1480
    %v1482 = vsel %vm172, %v1479, 0.0
    %1483 = vadd.xlane.f32.xlu0 %v1482
    %v1484 = vpop.xlane.xlu0 %1483
    %v1485 = vsel %vm172, %v1481, 0.0
    %1486 = vadd.xlane.f32.xlu0 %v1485
    %v1487 = vpop.xlane.xlu0 %1486
    %v1488 = vrcp.pop %v1484
    %v1489 = vrcp.pop %v1487
    %v1490 = vmul.f32 %v1479, %v1488
    %v1491 = vmul.f32 %v1481, %v1489
    %v1492 = vpack.c.bf16 %v1491, %v1490
    %1493 = vrot.lane.b32.xlu0 %v1040, 40
    %v1494 = vpop.permute.xlu0 %1493
    %v1497 = vsel %vm172, %v1492, 0
    %1499 = vmatprep.subr.bf16.mxu0 0
    %1500 = vmatpush1.bf16.msra.mxu0 0
    %1501 = vmatprep.subr.bf16.mxu0 0
    %1502 = vmatpush1.bf16.msra.mxu0 0
    %1503 = vmatprep.subr.bf16.mxu0 0
    %1504 = vmatpush1.bf16.msra.mxu0 0
    %1505 = vmatprep.subr.bf16.mxu0 0
    %1506 = vmatpush1.bf16.msra.mxu0 0
    %1507 = vmatprep.subr.bf16.mxu0 0
    %1508 = vmatpush1.bf16.msra.mxu0 0
    %1509 = vmatprep.subr.bf16.mxu0 0
    %1510 = vmatpush1.bf16.msra.mxu0 0
    %1511 = vmatprep.subr.bf16.mxu0 0
    %1512 = vmatpush1.bf16.msra.mxu0 0
    %1513 = vmatprep.subr.bf16.mxu0 0
    %1514 = vmatpush1.bf16.msra.mxu0 %v1494
    %1515 = vmatprep.subr.bf16.mxu0 0
    %1516 = vmatpush2.bf16.msra.mxu0 0
    %1517 = vmatprep.subr.bf16.mxu0 0
    %1518 = vmatpush2.bf16.msra.mxu0 0
    %1519 = vmatprep.subr.bf16.mxu0 0
    %1520 = vmatpush2.bf16.msra.mxu0 0
    %1521 = vmatprep.subr.bf16.mxu0 0
    %1522 = vmatpush2.bf16.msra.mxu0 0
    %1523 = vmatprep.subr.bf16.mxu0 0
    %1524 = vmatpush2.bf16.msra.mxu0 0
    %1525 = vmatprep.subr.bf16.mxu0 0
    %1526 = vmatpush2.bf16.msra.mxu0 0
    %1527 = vmatprep.subr.bf16.mxu0 0
    %1528 = vmatpush2.bf16.msra.mxu0 0
    %1529 = vmatprep.subr.bf16.mxu0 0
    %1530 = vmatpush2.bf16.msra.mxu0 0
    %1531 = vmatprep.mubr.bf16.mxu0 0
    %1532 = vmatmul.mubr.bf16.gmra.mxu0 %v1497
    %v1533 = vpop.f32.mrf.mxu0
    %v1534 = vadd.f32 0.0, %v1533
    %v1535 = vpop.f32.mrf.mxu0
    %v1536 = vpop.f32.mrf.mxu0
    %v1537 = vadd.f32 0.0, %v1536
    %v1538 = vpop.f32.mrf.mxu0
    %1539 = vdwg.mxu0
    %1542 = vrot.lane.b32.xlu0 %v1284, 8
    %v1543 = vpop.permute.xlu0 %1542
    %1544 = vrot.lane.b32.xlu0 %v1287, 8
    %v1545 = vpop.permute.xlu0 %1544
    %1550 = vrot.lane.b32.xlu0 %v1409, 16
    %v1551 = vpop.permute.xlu0 %1550
    %1552 = vrot.lane.b32.xlu0 %v1412, 16
    %v1553 = vpop.permute.xlu0 %1552
    %1558 = vrot.lane.b32.xlu0 %v1534, 24
    %v1559 = vpop.permute.xlu0 %1558
    %1560 = vrot.lane.b32.xlu0 %v1537, 24
    %v1561 = vpop.permute.xlu0 %1560
    %v1564 = vsel %vm120, %v1159, %v1543
    %v1565 = vsel %vm120, %v1162, %v1545
    %v1566 = vsel %vm172, %v1564, %v1551
    %v1567 = vsel %vm172, %v1565, %v1553
    %v1568 = vsel %vm646, %v1566, %v1559
    %v1569 = vsel %vm646, %v1567, %v1561
    %v1570 = vld [vmem:[%s974 + $0x10] sm:$0xf]
    %v1571 = vld [vmem:[%s974 + $0x14] sm:$0xf]
    %v1572 = vld [vmem:[%s974 + $0x18] sm:$0xf]
    %v1573 = vld [vmem:[%s974 + $0x1c] sm:$0xf]
    %v1574 = vpack.c.bf16 %v1569, %v1568
    %v1575 = vlaneseq
    %v1576 = vshrl.u32 %v1575, 7
    %v1577 = vsub.s32 1, %v1576
    %v1578 = vrot.slane %v973, %v1577
    %v1583 = vunpack.c.l.b16 %v1570
    %v1584 = vunpack.c.l.b16 %v1571
    %v1585 = vunpack.c.l.b16 %v1572
    %v1586 = vunpack.c.l.b16 %v1573
    %v1587 = vpack.c.b16 %v1584, %v1583
    %v1588 = vpack.c.b16 %v1586, %v1585
    %v1592 = vsel %vm71, %v1574, 0
    %1594 = vmatprep.subr.bf16.mxu0 0
    %1595 = vmatpush1.bf16.msra.mxu0 0
    %1596 = vmatprep.subr.bf16.mxu0 0
    %1597 = vmatpush1.bf16.msra.mxu0 0
    %1598 = vmatprep.subr.bf16.mxu0 0
    %1599 = vmatpush1.bf16.msra.mxu0 0
    %1600 = vmatprep.subr.bf16.mxu0 0
    %1601 = vmatpush1.bf16.msra.mxu0 0
    %1602 = vmatprep.subr.bf16.mxu0 0
    %1603 = vmatpush1.bf16.msra.mxu0 0
    %1604 = vmatprep.subr.bf16.mxu0 0
    %1605 = vmatpush1.bf16.msra.mxu0 0
    %1606 = vmatprep.subr.bf16.mxu0 0
    %1607 = vmatpush1.bf16.msra.mxu0 %v1588
    %1608 = vmatprep.subr.bf16.mxu0 0
    %1609 = vmatpush1.bf16.msra.mxu0 %v1587
    %1610 = vmatprep.subr.bf16.mxu0 0
    %1611 = vmatpush2.bf16.msra.mxu0 0
    %1612 = vmatprep.subr.bf16.mxu0 0
    %1613 = vmatpush2.bf16.msra.mxu0 0
    %1614 = vmatprep.subr.bf16.mxu0 0
    %1615 = vmatpush2.bf16.msra.mxu0 0
    %1616 = vmatprep.subr.bf16.mxu0 0
    %1617 = vmatpush2.bf16.msra.mxu0 0
    %1618 = vmatprep.subr.bf16.mxu0 0
    %1619 = vmatpush2.bf16.msra.mxu0 0
    %1620 = vmatprep.subr.bf16.mxu0 0
    %1621 = vmatpush2.bf16.msra.mxu0 0
    %1622 = vmatprep.subr.bf16.mxu0 0
    %1623 = vmatpush2.bf16.msra.mxu0 0
    %1624 = vmatprep.subr.bf16.mxu0 0
    %1625 = vmatpush2.bf16.msra.mxu0 0
    %1626 = vmatprep.mubr.bf16.mxu0 0
    %1627 = vmatmul.mubr.bf16.gmra.mxu0 %v1592
    %v1628 = vpop.f32.mrf.mxu0
    %v1629 = vadd.f32 %v1578, %v1628
    %v1630 = vpop.f32.mrf.mxu0
    %v1631 = vpop.f32.mrf.mxu0
    %v1632 = vadd.f32 %v1578, %v1631
    %v1633 = vpop.f32.mrf.mxu0
    %1634 = vdwg.mxu0
    %v1635 = vadd.f32 %v970, %v1629
    %v1636 = vadd.f32 %v971, %v1632
    %v1637 = vsel %vm71, %v1635, 0.0
    %1638 = vadd.xlane.f32.xlu0 %v1637
    %v1639 = vpop.xlane.xlu0 %1638
    %v1640 = vsel %vm71, %v1636, 0.0
    %1641 = vadd.xlane.f32.xlu0 %v1640
    %v1642 = vpop.xlane.xlu0 %1641
    %v1643 = vmul.f32 %v1639, %v722
    %v1644 = vmul.f32 %v1642, %v722
    %v1645 = vsub.f32 %v1635, %v1643
    %v1646 = vsub.f32 %v1636, %v1644
    %v1647 = vmul.f32 %v1645, %v1645
    %v1648 = vmul.f32 %v1646, %v1646
    %v1649 = vsel %vm71, %v1647, 0.0
    %1650 = vadd.xlane.f32.xlu0 %v1649
    %v1651 = vpop.xlane.xlu0 %1650
    %v1652 = vsel %vm71, %v1648, 0.0
    %1653 = vadd.xlane.f32.xlu0 %v1652
    %v1654 = vpop.xlane.xlu0 %1653
    %v1655 = vmul.f32 %v1651, %v722
    %v1656 = vmul.f32 %v1654, %v722
    %v1657 = vadd.f32 %v1655, 1e-05
    %v1658 = vadd.f32 %v1656, 1e-05
    %v1659 = vrsqrt.pop %v1657
    %v1660 = vrsqrt.pop %v1658
    %v1661 = vmul.f32 %v1645, %v1659
    %v1662 = vmul.f32 %v1646, %v1660
    %v1663 = vlaneseq
    %v1664 = vshrl.u32 %v1663, 7
    %v1665 = vsub.s32 4, %v1664
    %v1666 = vrot.slane %v973, %v1665
    %v1667 = vmul.f32 %v1661, %v1666
    %v1668 = vmul.f32 %v1662, %v1666
    %v1669 = vlaneseq
    %v1670 = vshrl.u32 %v1669, 7
    %v1671 = vsub.s32 5, %v1670
    %v1672 = vrot.slane %v973, %v1671
    %v1673 = vadd.f32 %v1667, %v1672
    %v1674 = vadd.f32 %v1668, %v1672
    %v1675 = vld [vmem:[%s974 + $0x20] sm:$0xf]
    %v1676 = vld [vmem:[%s974 + $0x24] sm:$0xf]
    %v1677 = vld [vmem:[%s974 + $0x28] sm:$0xf]
    %v1678 = vld [vmem:[%s974 + $0x2c] sm:$0xf]
    %v1679 = vpack.c.bf16 %v1674, %v1673
    %v1680 = vlaneseq
    %v1681 = vshrl.u32 %v1680, 7
    %v1682 = vsub.s32 2, %v1681
    %v1683 = vrot.slane %v973, %v1682
    %v1688 = vunpack.c.l.b16 %v1675
    %v1689 = vunpack.c.l.b16 %v1676
    %v1690 = vunpack.c.l.b16 %v1677
    %v1691 = vunpack.c.l.b16 %v1678
    %v1692 = vpack.c.b16 %v1689, %v1688
    %v1693 = vpack.c.b16 %v1691, %v1690
    %v1697 = vsel %vm71, %v1679, 0
    %1699 = vmatprep.subr.bf16.mxu0 0
    %1700 = vmatpush1.bf16.msra.mxu0 0
    %1701 = vmatprep.subr.bf16.mxu0 0
    %1702 = vmatpush1.bf16.msra.mxu0 0
    %1703 = vmatprep.subr.bf16.mxu0 0
    %1704 = vmatpush1.bf16.msra.mxu0 0
    %1705 = vmatprep.subr.bf16.mxu0 0
    %1706 = vmatpush1.bf16.msra.mxu0 0
    %1707 = vmatprep.subr.bf16.mxu0 0
    %1708 = vmatpush1.bf16.msra.mxu0 0
    %1709 = vmatprep.subr.bf16.mxu0 0
    %1710 = vmatpush1.bf16.msra.mxu0 0
    %1711 = vmatprep.subr.bf16.mxu0 0
    %1712 = vmatpush1.bf16.msra.mxu0 %v1693
    %1713 = vmatprep.subr.bf16.mxu0 0
    %1714 = vmatpush1.bf16.msra.mxu0 %v1692
    %1715 = vmatprep.subr.bf16.mxu0 0
    %1716 = vmatpush2.bf16.msra.mxu0 0
    %1717 = vmatprep.subr.bf16.mxu0 0
    %1718 = vmatpush2.bf16.msra.mxu0 0
    %1719 = vmatprep.subr.bf16.mxu0 0
    %1720 = vmatpush2.bf16.msra.mxu0 0
    %1721 = vmatprep.subr.bf16.mxu0 0
    %1722 = vmatpush2.bf16.msra.mxu0 0
    %1723 = vmatprep.subr.bf16.mxu0 0
    %1724 = vmatpush2.bf16.msra.mxu0 0
    %1725 = vmatprep.subr.bf16.mxu0 0
    %1726 = vmatpush2.bf16.msra.mxu0 0
    %1727 = vmatprep.subr.bf16.mxu0 0
    %1728 = vmatpush2.bf16.msra.mxu0 0
    %1729 = vmatprep.subr.bf16.mxu0 0
    %1730 = vmatpush2.bf16.msra.mxu0 0
    %1731 = vmatprep.mubr.bf16.mxu0 0
    %1732 = vmatmul.mubr.bf16.gmra.mxu0 %v1697
    %v1733 = vpop.f32.mrf.mxu0
    %v1734 = vadd.f32 %v1683, %v1733
    %v1735 = vpop.f32.mrf.mxu0
    %v1736 = vpop.f32.mrf.mxu0
    %v1737 = vadd.f32 %v1683, %v1736
    %v1738 = vpop.f32.mrf.mxu0
    %1739 = vdwg.mxu0
    %v1740 = vmax.f32 %v1734, 0.0
    %v1741 = vmax.f32 %v1737, 0.0
    %v1742 = vld [vmem:[%s974 + $0x30] sm:$0xf]
    %v1743 = vld [vmem:[%s974 + $0x34] sm:$0xf]
    %v1744 = vld [vmem:[%s974 + $0x38] sm:$0xf]
    %v1745 = vld [vmem:[%s974 + $0x3c] sm:$0xf]
    %v1746 = vld [vmem:[%s974 + $0x40] sm:$0xf]
    %v1747 = vld [vmem:[%s974 + $0x44] sm:$0xf]
    %v1748 = vld [vmem:[%s974 + $0x48] sm:$0xf]
    %v1749 = vld [vmem:[%s974 + $0x4c] sm:$0xf]
    %v1750 = vld [vmem:[%s974 + $0x50] sm:$0xf]
    %v1751 = vld [vmem:[%s974 + $0x54] sm:$0xf]
    %v1752 = vld [vmem:[%s974 + $0x58] sm:$0xf]
    %v1753 = vld [vmem:[%s974 + $0x5c] sm:$0xf]
    %v1754 = vld [vmem:[%s974 + $0x60] sm:$0xf]
    %v1755 = vld [vmem:[%s974 + $0x64] sm:$0xf]
    %v1756 = vld [vmem:[%s974 + $0x68] sm:$0xf]
    %v1757 = vld [vmem:[%s974 + $0x6c] sm:$0xf]
    %v1758 = vpack.c.bf16 %v1741, %v1740
    %v1759 = vlaneseq
    %v1760 = vshrl.u32 %v1759, 7
    %v1761 = vsub.s32 3, %v1760
    %v1762 = vrot.slane %v973, %v1761
    %v1779 = vunpack.c.l.b16 %v1742
    %v1780 = vunpack.c.l.b16 %v1743
    %v1781 = vunpack.c.l.b16 %v1744
    %v1782 = vunpack.c.l.b16 %v1745
    %v1783 = vunpack.c.l.b16 %v1746
    %v1784 = vunpack.c.l.b16 %v1747
    %v1785 = vunpack.c.l.b16 %v1748
    %v1786 = vunpack.c.l.b16 %v1749
    %v1787 = vunpack.c.l.b16 %v1750
    %v1788 = vunpack.c.l.b16 %v1751
    %v1789 = vunpack.c.l.b16 %v1752
    %v1790 = vunpack.c.l.b16 %v1753
    %v1791 = vunpack.c.l.b16 %v1754
    %v1792 = vunpack.c.l.b16 %v1755
    %v1793 = vunpack.c.l.b16 %v1756
    %v1794 = vunpack.c.l.b16 %v1757
    %v1795 = vpack.c.b16 %v1780, %v1779
    %v1796 = vpack.c.b16 %v1782, %v1781
    %v1797 = vpack.c.b16 %v1784, %v1783
    %v1798 = vpack.c.b16 %v1786, %v1785
    %v1799 = vpack.c.b16 %v1788, %v1787
    %v1800 = vpack.c.b16 %v1790, %v1789
    %v1801 = vpack.c.b16 %v1792, %v1791
    %v1802 = vpack.c.b16 %v1794, %v1793
    %1811 = vmatprep.subr.bf16.mxu0 0
    %1812 = vmatpush1.bf16.msra.mxu0 %v1802
    %1813 = vmatprep.subr.bf16.mxu0 0
    %1814 = vmatpush1.bf16.msra.mxu0 %v1801
    %1815 = vmatprep.subr.bf16.mxu0 0
    %1816 = vmatpush1.bf16.msra.mxu0 %v1800
    %1817 = vmatprep.subr.bf16.mxu0 0
    %1818 = vmatpush1.bf16.msra.mxu0 %v1799
    %1819 = vmatprep.subr.bf16.mxu0 0
    %1820 = vmatpush1.bf16.msra.mxu0 %v1798
    %1821 = vmatprep.subr.bf16.mxu0 0
    %1822 = vmatpush1.bf16.msra.mxu0 %v1797
    %1823 = vmatprep.subr.bf16.mxu0 0
    %1824 = vmatpush1.bf16.msra.mxu0 %v1796
    %1825 = vmatprep.subr.bf16.mxu0 0
    %1826 = vmatpush1.bf16.msra.mxu0 %v1795
    %1827 = vmatprep.subr.bf16.mxu0 0
    %1828 = vmatpush2.bf16.msra.mxu0 0
    %1829 = vmatprep.subr.bf16.mxu0 0
    %1830 = vmatpush2.bf16.msra.mxu0 0
    %1831 = vmatprep.subr.bf16.mxu0 0
    %1832 = vmatpush2.bf16.msra.mxu0 0
    %1833 = vmatprep.subr.bf16.mxu0 0
    %1834 = vmatpush2.bf16.msra.mxu0 0
    %1835 = vmatprep.subr.bf16.mxu0 0
    %1836 = vmatpush2.bf16.msra.mxu0 0
    %1837 = vmatprep.subr.bf16.mxu0 0
    %1838 = vmatpush2.bf16.msra.mxu0 0
    %1839 = vmatprep.subr.bf16.mxu0 0
    %1840 = vmatpush2.bf16.msra.mxu0 0
    %1841 = vmatprep.subr.bf16.mxu0 0
    %1842 = vmatpush2.bf16.msra.mxu0 0
    %1843 = vmatprep.mubr.bf16.mxu0 0
    %1844 = vmatmul.mubr.bf16.gmra.mxu0 %v1758
    %v1845 = vpop.f32.mrf.mxu0
    %v1846 = vadd.f32 %v1762, %v1845
    %v1847 = vpop.f32.mrf.mxu0
    %v1848 = vpop.f32.mrf.mxu0
    %v1849 = vadd.f32 %v1762, %v1848
    %v1850 = vpop.f32.mrf.mxu0
    %1851 = vdwg.mxu0
    %v1852 = vadd.f32 %v1673, %v1846
    %v1853 = vadd.f32 %v1674, %v1849
    %v1854 = vsel %vm71, %v1852, 0.0
    %1855 = vadd.xlane.f32.xlu0 %v1854
    %v1856 = vpop.xlane.xlu0 %1855
    %v1857 = vsel %vm71, %v1853, 0.0
    %1858 = vadd.xlane.f32.xlu0 %v1857
    %v1859 = vpop.xlane.xlu0 %1858
    %v1860 = vmul.f32 %v1856, %v722
    %v1861 = vmul.f32 %v1859, %v722
    %v1862 = vsub.f32 %v1852, %v1860
    %v1863 = vsub.f32 %v1853, %v1861
    %v1864 = vmul.f32 %v1862, %v1862
    %v1865 = vmul.f32 %v1863, %v1863
    %v1866 = vsel %vm71, %v1864, 0.0
    %1867 = vadd.xlane.f32.xlu0 %v1866
    %v1868 = vpop.xlane.xlu0 %1867
    %v1869 = vsel %vm71, %v1865, 0.0
    %1870 = vadd.xlane.f32.xlu0 %v1869
    %v1871 = vpop.xlane.xlu0 %1870
    %v1872 = vmul.f32 %v1868, %v722
    %v1873 = vmul.f32 %v1871, %v722
    %v1874 = vadd.f32 %v1872, 1e-05
    %v1875 = vadd.f32 %v1873, 1e-05
    %v1876 = vrsqrt.pop %v1874
    %v1877 = vrsqrt.pop %v1875
    %v1878 = vmul.f32 %v1862, %v1876
    %v1879 = vmul.f32 %v1863, %v1877
    %v1880 = vlaneseq
    %v1881 = vshrl.u32 %v1880, 7
    %v1882 = vsub.s32 6, %v1881
    %v1883 = vrot.slane %v973, %v1882
    %v1884 = vmul.f32 %v1878, %v1883
    %v1885 = vmul.f32 %v1879, %v1883
    %v1886 = vlaneseq
    %v1887 = vshrl.u32 %v1886, 7
    %v1888 = vsub.s32 7, %v1887
    %v1889 = vrot.slane %v973, %v1888
    %v1890 = vadd.f32 %v1884, %v1889
    %v1891 = vadd.f32 %v1885, %v1889
    %v1892 = vld [vmem:[%s5] sm:$0xf]
    %v1893 = vld [vmem:[%s5 + $0x4] sm:$0xf]
    %v1894 = vld [vmem:[%s5 + $0x8] sm:$0xf]
    %v1895 = vld [vmem:[%s5 + $0xc] sm:$0xf]
    %v1896 = vpack.c.bf16 %v1891, %v1890
    %v1897 = vld [vmem:[%s6] sm:$0x1]
    %v1898 = vlaneseq
    %v1899 = vshrl.u32 %v1898, 7
    %v1900 = vsub.s32 0, %v1899
    %v1901 = vrot.slane %v1897, %v1900
    %v1906 = vunpack.c.l.b16 %v1892
    %v1907 = vunpack.c.l.b16 %v1893
    %v1908 = vunpack.c.l.b16 %v1894
    %v1909 = vunpack.c.l.b16 %v1895
    %v1910 = vpack.c.b16 %v1907, %v1906
    %v1911 = vpack.c.b16 %v1909, %v1908
    %v1915 = vsel %vm71, %v1896, 0
    %1917 = vmatprep.subr.bf16.mxu0 0
    %1918 = vmatpush1.bf16.msra.mxu0 0
    %1919 = vmatprep.subr.bf16.mxu0 0
    %1920 = vmatpush1.bf16.msra.mxu0 0
    %1921 = vmatprep.subr.bf16.mxu0 0
    %1922 = vmatpush1.bf16.msra.mxu0 0
    %1923 = vmatprep.subr.bf16.mxu0 0
    %1924 = vmatpush1.bf16.msra.mxu0 0
    %1925 = vmatprep.subr.bf16.mxu0 0
    %1926 = vmatpush1.bf16.msra.mxu0 0
    %1927 = vmatprep.subr.bf16.mxu0 0
    %1928 = vmatpush1.bf16.msra.mxu0 0
    %1929 = vmatprep.subr.bf16.mxu0 0
    %1930 = vmatpush1.bf16.msra.mxu0 %v1911
    %1931 = vmatprep.subr.bf16.mxu0 0
    %1932 = vmatpush1.bf16.msra.mxu0 %v1910
    %1933 = vmatprep.subr.bf16.mxu0 0
    %1934 = vmatpush2.bf16.msra.mxu0 0
    %1935 = vmatprep.subr.bf16.mxu0 0
    %1936 = vmatpush2.bf16.msra.mxu0 0
    %1937 = vmatprep.subr.bf16.mxu0 0
    %1938 = vmatpush2.bf16.msra.mxu0 0
    %1939 = vmatprep.subr.bf16.mxu0 0
    %1940 = vmatpush2.bf16.msra.mxu0 0
    %1941 = vmatprep.subr.bf16.mxu0 0
    %1942 = vmatpush2.bf16.msra.mxu0 0
    %1943 = vmatprep.subr.bf16.mxu0 0
    %1944 = vmatpush2.bf16.msra.mxu0 0
    %1945 = vmatprep.subr.bf16.mxu0 0
    %1946 = vmatpush2.bf16.msra.mxu0 0
    %1947 = vmatprep.subr.bf16.mxu0 0
    %1948 = vmatpush2.bf16.msra.mxu0 0
    %1949 = vmatprep.mubr.bf16.mxu0 0
    %1950 = vmatmul.mubr.bf16.gmra.mxu0 %v1915
    %v1951 = vpop.f32.mrf.mxu0
    %v1952 = vadd.f32 %v1901, %v1951
    %v1953 = vpop.f32.mrf.mxu0
    %v1954 = vpop.f32.mrf.mxu0
    %v1955 = vadd.f32 %v1901, %v1954
    %v1956 = vpop.f32.mrf.mxu0
    %1957 = vdwg.mxu0
    %v1958 = vmax.f32 %v1952, 0.0
    %v1959 = vmax.f32 %v1955, 0.0
    %v1960 = vld [vmem:[%s5 + $0x10] sm:$0xf]
    %v1961 = vld [vmem:[%s5 + $0x14] sm:$0xf]
    %v1962 = vld [vmem:[%s5 + $0x18] sm:$0xf]
    %v1963 = vld [vmem:[%s5 + $0x1c] sm:$0xf]
    %v1964 = vld [vmem:[%s5 + $0x20] sm:$0xf]
    %v1965 = vld [vmem:[%s5 + $0x24] sm:$0xf]
    %v1966 = vld [vmem:[%s5 + $0x28] sm:$0xf]
    %v1967 = vld [vmem:[%s5 + $0x2c] sm:$0xf]
    %v1968 = vld [vmem:[%s5 + $0x30] sm:$0xf]
    %v1969 = vld [vmem:[%s5 + $0x34] sm:$0xf]
    %v1970 = vld [vmem:[%s5 + $0x38] sm:$0xf]
    %v1971 = vld [vmem:[%s5 + $0x3c] sm:$0xf]
    %v1972 = vld [vmem:[%s5 + $0x40] sm:$0xf]
    %v1973 = vld [vmem:[%s5 + $0x44] sm:$0xf]
    %v1974 = vld [vmem:[%s5 + $0x48] sm:$0xf]
    %v1975 = vld [vmem:[%s5 + $0x4c] sm:$0xf]
    %v1976 = vpack.c.bf16 %v1959, %v1958
    %v1977 = vld [vmem:[%s6 + $0x1] sm:$0x1]
    %v1978 = vlaneseq
    %v1979 = vshrl.u32 %v1978, 7
    %v1980 = vsub.s32 0, %v1979
    %v1981 = vrot.slane %v1977, %v1980
    %v1998 = vunpack.c.l.b16 %v1960
    %v1999 = vunpack.c.l.b16 %v1961
    %v2000 = vunpack.c.l.b16 %v1962
    %v2001 = vunpack.c.l.b16 %v1963
    %v2002 = vunpack.c.l.b16 %v1964
    %v2003 = vunpack.c.l.b16 %v1965
    %v2004 = vunpack.c.l.b16 %v1966
    %v2005 = vunpack.c.l.b16 %v1967
    %v2006 = vunpack.c.l.b16 %v1968
    %v2007 = vunpack.c.l.b16 %v1969
    %v2008 = vunpack.c.l.b16 %v1970
    %v2009 = vunpack.c.l.b16 %v1971
    %v2010 = vunpack.c.l.b16 %v1972
    %v2011 = vunpack.c.l.b16 %v1973
    %v2012 = vunpack.c.l.b16 %v1974
    %v2013 = vunpack.c.l.b16 %v1975
    %v2014 = vpack.c.b16 %v1999, %v1998
    %v2015 = vpack.c.b16 %v2001, %v2000
    %v2016 = vpack.c.b16 %v2003, %v2002
    %v2017 = vpack.c.b16 %v2005, %v2004
    %v2018 = vpack.c.b16 %v2007, %v2006
    %v2019 = vpack.c.b16 %v2009, %v2008
    %v2020 = vpack.c.b16 %v2011, %v2010
    %v2021 = vpack.c.b16 %v2013, %v2012
    %2030 = vmatprep.subr.bf16.mxu0 0
    %2031 = vmatpush1.bf16.msra.mxu0 %v2021
    %2032 = vmatprep.subr.bf16.mxu0 0
    %2033 = vmatpush1.bf16.msra.mxu0 %v2020
    %2034 = vmatprep.subr.bf16.mxu0 0
    %2035 = vmatpush1.bf16.msra.mxu0 %v2019
    %2036 = vmatprep.subr.bf16.mxu0 0
    %2037 = vmatpush1.bf16.msra.mxu0 %v2018
    %2038 = vmatprep.subr.bf16.mxu0 0
    %2039 = vmatpush1.bf16.msra.mxu0 %v2017
    %2040 = vmatprep.subr.bf16.mxu0 0
    %2041 = vmatpush1.bf16.msra.mxu0 %v2016
    %2042 = vmatprep.subr.bf16.mxu0 0
    %2043 = vmatpush1.bf16.msra.mxu0 %v2015
    %2044 = vmatprep.subr.bf16.mxu0 0
    %2045 = vmatpush1.bf16.msra.mxu0 %v2014
    %2046 = vmatprep.subr.bf16.mxu0 0
    %2047 = vmatpush2.bf16.msra.mxu0 0
    %2048 = vmatprep.subr.bf16.mxu0 0
    %2049 = vmatpush2.bf16.msra.mxu0 0
    %2050 = vmatprep.subr.bf16.mxu0 0
    %2051 = vmatpush2.bf16.msra.mxu0 0
    %2052 = vmatprep.subr.bf16.mxu0 0
    %2053 = vmatpush2.bf16.msra.mxu0 0
    %2054 = vmatprep.subr.bf16.mxu0 0
    %2055 = vmatpush2.bf16.msra.mxu0 0
    %2056 = vmatprep.subr.bf16.mxu0 0
    %2057 = vmatpush2.bf16.msra.mxu0 0
    %2058 = vmatprep.subr.bf16.mxu0 0
    %2059 = vmatpush2.bf16.msra.mxu0 0
    %2060 = vmatprep.subr.bf16.mxu0 0
    %2061 = vmatpush2.bf16.msra.mxu0 0
    %2062 = vmatprep.mubr.bf16.mxu0 0
    %2063 = vmatmul.mubr.bf16.gmra.mxu0 %v1976
    %v2064 = vpop.f32.mrf.mxu0
    %v2065 = vadd.f32 %v1981, %v2064
    %v2066 = vpop.f32.mrf.mxu0
    %v2067 = vpop.f32.mrf.mxu0
    %v2068 = vadd.f32 %v1981, %v2067
    %v2069 = vpop.f32.mrf.mxu0
    %2070 = vdwg.mxu0
    %2071 = vmax.xlane.f32.xlu0 %v2065
    %v2072 = vpop.xlane.xlu0 %2071
    %2073 = vmax.xlane.f32.xlu0 %v2068
    %v2074 = vpop.xlane.xlu0 %2073
    %v2075 = vsub.f32 %v2065, %v2072
    %v2076 = vsub.f32 %v2068, %v2074
    %v2077 = vmul.f32 %v2075, 1.442695
    %v2078 = vpow.pop %v2077
    %v2079 = vmul.f32 %v2076, 1.442695
    %v2080 = vpow.pop %v2079
    %2081 = vadd.xlane.f32.xlu0 %v2078
    %v2082 = vpop.xlane.xlu0 %2081
    %2083 = vadd.xlane.f32.xlu0 %v2080
    %v2084 = vpop.xlane.xlu0 %2083
    %v2085 = vlog2.pop %v2082
    %v2086 = vmul.f32 %v2085, 0.6931472
    %v2087 = vlog2.pop %v2084
    %v2088 = vmul.f32 %v2087, 0.6931472
    %v2089 = vadd.f32 %v2086, %v2072
    %v2090 = vadd.f32 %v2088, %v2074
    %v2091 = vsub.f32 %v2065, %v2089
    %v2092 = vsub.f32 %v2068, %v2090
    %2093 = vst [vmem:[%s7] sm:$0xff] %v2091
    %2094 = vst [vmem:[%s7 + $0x8] sm:$0xff] %v2092
    // Predicated region
    $region34: #{transformer_decoder_forward.1} parent=1 // pred_check
      _
    $region35: #{transformer_decoder_forward.1} parent=1 // pred_check_branch
      %2096 = sbr.rel (0) target = $region37
    $region36: #{transformer_decoder_forward.1} parent=1 // pred_region
      _
    $region37: #{transformer_decoder_forward.1} parent=1 // pred_fallthru
      _
    // Predicated region
    $region38: #{transformer_decoder_forward.1} parent=1 // pred_check
      _
    $region39: #{transformer_decoder_forward.1} parent=1 // pred_check_branch
      %2098 = sbr.rel (0) target = $region41
    $region40: #{transformer_decoder_forward.1} parent=1 // pred_region
      _
    $region41: #{transformer_decoder_forward.1} parent=1 // pred_fallthru
      _
    %2099 = vsyncpa [#allocation3], 1

</llo_original>
